<compile_context>
chip_gen: v5e
topology: v5e:2x2
jax: 0.10.0
libtpu: 0.0.40
codegen_flags: <defaults>
</compile_context>

<pallas_src>
import functools

import jax
import jax.numpy as jnp
from jax.experimental import pallas as pl
from jax.experimental.pallas import tpu as pltpu

LATENT_DIM = 20
HIDDEN_DIM = 400
OUTPUT_DIM = 784  # 28*28 MNIST, the canonical VAE decoder output


def _round_up(x, m):
    return ((x + m - 1) // m) * m


def _choose_tm(B):
    """Batch tile: big enough to feed the MXU, >=2 grid steps when possible."""
    if B >= 512:
        return 256
    if B >= 16:
        # split into >=2 steps, keep the tile a multiple of 8 (sublane)
        return max(8, (B // 2) // 8 * 8)
    return max(B, 1)


def decoder_kernel(z_ref, w1_ref, b1_ref, w2_ref, b2_ref, o_ref):
    # fc1 + relu  (bf16 MXU matmul, f32 accumulate)
    z = z_ref[...].astype(jnp.bfloat16)
    h = jnp.dot(z, w1_ref[...], preferred_element_type=jnp.float32)
    h = h + b1_ref[...]                      # (tm, Hp) + (1, Hp) broadcast
    h = jnp.maximum(h, 0.0)                  # relu on VPU
    # fc2 + sigmoid
    y = jnp.dot(h.astype(jnp.bfloat16), w2_ref[...],
                preferred_element_type=jnp.float32)
    y = y + b2_ref[...]                      # (tm, Op) + (1, Op) broadcast
    o_ref[...] = jax.nn.sigmoid(y).astype(o_ref.dtype)


@functools.partial(jax.jit, static_argnames=("tm",))
def decoder_forward(z, w1, b1, w2, b2, *, tm=None):
    B, L = z.shape
    H = w1.shape[1]
    O = w2.shape[1]
    if tm is None:
        tm = _choose_tm(B)

    # Lane-pad feature dims to multiples of 128 (unmasked stores, clean MXU
    # tiles); pad batch so it divides evenly into tm-row tiles.
    Hp = _round_up(H, 128)          # 400 -> 512
    Op = _round_up(O, 128)          # 784 -> 896
    Bp = pl.cdiv(B, tm) * tm

    zp = jnp.pad(z, ((0, Bp - B), (0, 0)))
    w1p = jnp.pad(w1, ((0, 0), (0, Hp - H))).astype(jnp.bfloat16)
    b1p = jnp.pad(b1, ((0, 0), (0, Hp - H)))
    w2p = jnp.pad(w2, ((0, Hp - H), (0, Op - O))).astype(jnp.bfloat16)
    b2p = jnp.pad(b2, ((0, 0), (0, Op - O)))

    grid = (Bp // tm,)
    out = pl.pallas_call(
        decoder_kernel,
        out_shape=jax.ShapeDtypeStruct((Bp, Op), jnp.float32),
        grid_spec=pltpu.PrefetchScalarGridSpec(
            num_scalar_prefetch=0,
            grid=grid,
            in_specs=[
                pl.BlockSpec((tm, L), lambda i: (i, 0)),    # z tile
                pl.BlockSpec((L, Hp), lambda i: (0, 0)),    # W1 (resident)
                pl.BlockSpec((1, Hp), lambda i: (0, 0)),    # b1
                pl.BlockSpec((Hp, Op), lambda i: (0, 0)),   # W2 (resident)
                pl.BlockSpec((1, Op), lambda i: (0, 0)),    # b2
            ],
            out_specs=pl.BlockSpec((tm, Op), lambda i: (i, 0)),
        ),
        compiler_params=pltpu.CompilerParams(
            dimension_semantics=("parallel",),
            vmem_limit_bytes=32 * 1024 * 1024),
    )(zp, w1p, b1p, w2p, b2p)

    # slice off batch / lane padding
    return out[:B, :O]


def decoder_ref(z, w1, b1, w2, b2):
    h = jnp.maximum(z @ w1 + b1, 0.0)
    return jax.nn.sigmoid(h @ w2 + b2)


if __name__ == "__main__":
    key = jax.random.PRNGKey(0)
    k_z, k_w1, k_b1, k_w2, k_b2 = jax.random.split(key, 5)

    # Deterministic synthetic parameters (shapes match nn.Linear(20, 400) /
    # nn.Linear(400, OUTPUT_DIM); stored transposed so forward is x @ W + b).
    w1 = jax.random.normal(k_w1, (LATENT_DIM, HIDDEN_DIM), jnp.float32) * 0.05
    b1 = jax.random.normal(k_b1, (1, HIDDEN_DIM), jnp.float32) * 0.05
    w2 = jax.random.normal(k_w2, (HIDDEN_DIM, OUTPUT_DIM), jnp.float32) * 0.05
    b2 = jax.random.normal(k_b2, (1, OUTPUT_DIM), jnp.float32) * 0.05

    ok = True
    # Small canonical batch, plus a batch that exercises multi-step tiling
    # and the batch-padding path.
    for B in (8, 96):
        z = jax.random.normal(k_z, (B, LATENT_DIM), dtype=jnp.float32)
        out = decoder_forward(z, w1, b1, w2, b2)
        out = jax.block_until_ready(out)
        ref = decoder_ref(z, w1, b1, w2, b2)
        assert out.shape == (B, OUTPUT_DIM)
        # bf16 weights + f32 accumulation: loosened tolerance vs f32 reference.
        ok = ok and bool(jnp.allclose(out, ref, atol=2e-2, rtol=2e-2))
        assert ok, f"mismatch vs reference at B={B}"

    print("KERNEL_OK")
</pallas_src>

<mosaic_0001>
module attributes {stable_mosaic.version = 11 : i64} {
  func.func @decoder_kernel(%arg0: i32, %arg1: memref<8x20xf32, #tpu.memory_space<vmem>>, %arg2: memref<20x512xbf16, #tpu.memory_space<vmem>>, %arg3: memref<1x512xf32, #tpu.memory_space<vmem>>, %arg4: memref<512x896xbf16, #tpu.memory_space<vmem>>, %arg5: memref<1x896xf32, #tpu.memory_space<vmem>>, %arg6: memref<8x896xf32, #tpu.memory_space<vmem>>) attributes {dimension_semantics = [#tpu.dimension_semantics<parallel>], iteration_bounds = array<i64: 1>, scalar_prefetch = 0 : i64, scratch_operands = 0 : i64, tpu.core_type = #tpu.core_type<tc>, window_params = [{transform_indices = @transform_0, window_bounds = array<i64: 8, 20>}, {pipeline_mode = #tpu.pipeline_mode<synchronous>, transform_indices = @transform_1, window_bounds = array<i64: 20, 512>}, {pipeline_mode = #tpu.pipeline_mode<synchronous>, transform_indices = @transform_2, window_bounds = array<i64: 1, 512>}, {pipeline_mode = #tpu.pipeline_mode<synchronous>, transform_indices = @transform_3, window_bounds = array<i64: 512, 896>}, {pipeline_mode = #tpu.pipeline_mode<synchronous>, transform_indices = @transform_4, window_bounds = array<i64: 1, 896>}, {transform_indices = @transform_5, window_bounds = array<i64: 8, 896>}]} {
    %c0 = arith.constant 0 : index
    %c0_0 = arith.constant 0 : index
    %0 = vector.load %arg1[%c0, %c0_0] : memref<8x20xf32, #tpu.memory_space<vmem>>, vector<8x20xf32>
    %1 = arith.truncf %0 : vector<8x20xf32> to vector<8x20xbf16>
    %c0_1 = arith.constant 0 : index
    %c0_2 = arith.constant 0 : index
    %2 = vector.load %arg2[%c0_1, %c0_2] : memref<20x512xbf16, #tpu.memory_space<vmem>>, vector<20x512xbf16>
    %cst = arith.constant dense<0.000000e+00> : vector<8x512xf32>
    %3 = tpu.matmul %1, %2, %cst {dimension_numbers = #tpu.dot_dimension_numbers<[1], [0], [0], [1], [0, 0, 1, 1], [], []>} : vector<8x20xbf16>, vector<20x512xbf16>, vector<8x512xf32> -> vector<8x512xf32>
    %c0_3 = arith.constant 0 : index
    %c0_4 = arith.constant 0 : index
    %4 = vector.load %arg3[%c0_3, %c0_4] : memref<1x512xf32, #tpu.memory_space<vmem>>, vector<1x512xf32>
    %5 = vector.broadcast %4 : vector<1x512xf32> to vector<8x512xf32>
    %6 = arith.addf %3, %5 : vector<8x512xf32>
    %cst_5 = arith.constant 0.000000e+00 : f32
    %7 = vector.broadcast %cst_5 : f32 to vector<8x512xf32>
    %8 = arith.maximumf %6, %7 : vector<8x512xf32>
    %9 = arith.truncf %8 : vector<8x512xf32> to vector<8x512xbf16>
    %c0_6 = arith.constant 0 : index
    %c0_7 = arith.constant 0 : index
    %10 = vector.load %arg4[%c0_6, %c0_7] : memref<512x896xbf16, #tpu.memory_space<vmem>>, vector<512x896xbf16>
    %cst_8 = arith.constant dense<0.000000e+00> : vector<8x896xf32>
    %11 = tpu.matmul %9, %10, %cst_8 {dimension_numbers = #tpu.dot_dimension_numbers<[1], [0], [0], [1], [0, 0, 1, 1], [], []>} : vector<8x512xbf16>, vector<512x896xbf16>, vector<8x896xf32> -> vector<8x896xf32>
    %c0_9 = arith.constant 0 : index
    %c0_10 = arith.constant 0 : index
    %12 = vector.load %arg5[%c0_9, %c0_10] : memref<1x896xf32, #tpu.memory_space<vmem>>, vector<1x896xf32>
    %13 = vector.broadcast %12 : vector<1x896xf32> to vector<8x896xf32>
    %14 = arith.addf %11, %13 : vector<8x896xf32>
    %15 = arith.negf %14 : vector<8x896xf32>
    %16 = math.exp %15 : vector<8x896xf32>
    %cst_11 = arith.constant 1.000000e+00 : f32
    %17 = vector.broadcast %cst_11 : f32 to vector<8x896xf32>
    %18 = arith.addf %17, %16 : vector<8x896xf32>
    %19 = arith.divf %17, %18 : vector<8x896xf32>
    %c0_12 = arith.constant 0 : index
    %c0_13 = arith.constant 0 : index
    %20 = vector.load %arg6[%c0_12, %c0_13] : memref<8x896xf32, #tpu.memory_space<vmem>>, vector<8x896xf32>
    tpu.vector_store %arg6[%c0_12, %c0_13], %19 {strides = array<i32>} : memref<8x896xf32, #tpu.memory_space<vmem>>, vector<8x896xf32>,
    return
  }
  func.func @transform_0(%arg0: i32) -> (i32, i32) {
    %c0_i32 = arith.constant 0 : i32
    %c0_i32_0 = arith.constant 0 : i32
    return %arg0, %c0_i32 : i32, i32
  }
  func.func @transform_1(%arg0: i32) -> (i32, i32) {
    %c0_i32 = arith.constant 0 : i32
    %c0_i32_0 = arith.constant 0 : i32
    %c0_i32_1 = arith.constant 0 : i32
    return %c0_i32, %c0_i32_0 : i32, i32
  }
  func.func @transform_2(%arg0: i32) -> (i32, i32) {
    %c0_i32 = arith.constant 0 : i32
    %c0_i32_0 = arith.constant 0 : i32
    %c0_i32_1 = arith.constant 0 : i32
    return %c0_i32, %c0_i32_0 : i32, i32
  }
  func.func @transform_3(%arg0: i32) -> (i32, i32) {
    %c0_i32 = arith.constant 0 : i32
    %c0_i32_0 = arith.constant 0 : i32
    %c0_i32_1 = arith.constant 0 : i32
    return %c0_i32, %c0_i32_0 : i32, i32
  }
  func.func @transform_4(%arg0: i32) -> (i32, i32) {
    %c0_i32 = arith.constant 0 : i32
    %c0_i32_0 = arith.constant 0 : i32
    %c0_i32_1 = arith.constant 0 : i32
    return %c0_i32, %c0_i32_0 : i32, i32
  }
  func.func @transform_5(%arg0: i32) -> (i32, i32) {
    %c0_i32 = arith.constant 0 : i32
    %c0_i32_0 = arith.constant 0 : i32
    return %arg0, %c0_i32 : i32, i32
  }
}

</mosaic_0001>

<llo_original>
// kernel: decoder_forward.1
$region0: #{decoder_forward.1}
  #allocation0 [shape = 'u32[]', space=smem, size = 0x4, offset = 0x4, fixed_abs, tag = 'smem constant byte address 0x4 - core index']
  #allocation1 [shape = 'u32[72,128]{1,0:T(1,128)}', space=vmem, size = 0x9000, scoped, tag = 'internal scratch']
  %s0 = inlined_call_operand.vmem [shape: f32[8,20], index: 0, kind: input, shape index: {}]
  %s1 = inlined_call_operand.vmem [shape: bf16[20,512], index: 1, kind: input, shape index: {}]
  %s2 = inlined_call_operand.vmem [shape: f32[1,512], index: 2, kind: input, shape index: {}]
  %s3 = inlined_call_operand.vmem [shape: bf16[512,896], index: 3, kind: input, shape index: {}]
  %s4 = inlined_call_operand.vmem [shape: f32[1,896], index: 4, kind: input, shape index: {}]
  %s5 = inlined_call_operand.hbm [shape: f32[8,896], index: 5, kind: output, shape index: {}]
  %s6 = sld [smem:[#allocation0]]
  $region30: #{decoder_forward.1} parent=0
    _
  %s8 = ssub.s32 1, %s6
  %s9 = scalar_select 0, %s8, %s6
  $region1: #{decoder_forward.1} parent=0
    #allocation2 [shape = 'u8[28672]{0}', space=vmem, size = 0x7000, scoped, tag = 'output window, operand 0, single buffered']
    #allocation3 [shape = 's32[1]{0}', space=sflag, size = 0x4, scoped, tag = 'scoped memory for decoder_forward.1']
    %10 = vsyncpa [#allocation3], 0
    // Predicated region
    $region2: #{decoder_forward.1} parent=1 // pred_check
      _
    $region3: #{decoder_forward.1} parent=1 // pred_check_branch
      %12 = sbr.rel (0) target = $region5
    $region4: #{decoder_forward.1} parent=1 // pred_region
      _
    $region5: #{decoder_forward.1} parent=1 // pred_fallthru
      _
    // Predicated region
    $region6: #{decoder_forward.1} parent=1 // pred_check
      _
    $region7: #{decoder_forward.1} parent=1 // pred_check_branch
      %14 = sbr.rel (0) target = $region9
    $region8: #{decoder_forward.1} parent=1 // pred_region
      _
    $region9: #{decoder_forward.1} parent=1 // pred_fallthru
      _
    // Predicated region
    $region10: #{decoder_forward.1} parent=1 // pred_check
      _
    $region11: #{decoder_forward.1} parent=1 // pred_check_branch
      %16 = sbr.rel (0) target = $region13
    $region12: #{decoder_forward.1} parent=1 // pred_region
      _
    $region13: #{decoder_forward.1} parent=1 // pred_fallthru
      _
    // Predicated region
    $region14: #{decoder_forward.1} parent=1 // pred_check
      _
    $region15: #{decoder_forward.1} parent=1 // pred_check_branch
      %18 = sbr.rel (0) target = $region17
    $region16: #{decoder_forward.1} parent=1 // pred_region
      _
    $region17: #{decoder_forward.1} parent=1 // pred_fallthru
      _
    // Predicated region
    $region18: #{decoder_forward.1} parent=1 // pred_check
      _
    $region19: #{decoder_forward.1} parent=1 // pred_check_branch
      %20 = sbr.rel (0) target = $region21
    $region20: #{decoder_forward.1} parent=1 // pred_region
      _
    $region21: #{decoder_forward.1} parent=1 // pred_fallthru
      _
    %v22 = vld [vmem:[%s0] sm:$0xff]
    %v23 = vpack.c.bf16 %v22, %v22
    %v24 = vld [vmem:[%s1] sm:$0xff]
    %v25 = vld [vmem:[%s1 + $0x8] sm:$0xff]
    %v26 = vld [vmem:[%s1 + $0x10] sm:$0xff]
    %v27 = vld [vmem:[%s1 + $0x18] sm:$0xff]
    %v28 = vld [vmem:[%s1 + $0x20] sm:$0x33]
    %v29 = vld [vmem:[%s1 + $0x28] sm:$0x33]
    %v30 = vld [vmem:[%s2] sm:$0xf]
    %v32 = vperm.slane %v30, 0
    %v33 = vperm.slane %v30, 1
    %v34 = vperm.slane %v30, 2
    %v35 = vperm.slane %v30, 3
    %v46 = vunpack.c.l.b16 %v24
    %v47 = vunpack.c.h.b16 %v24
    %v48 = vunpack.c.l.b16 %v25
    %v49 = vunpack.c.h.b16 %v25
    %v50 = vunpack.c.l.b16 %v26
    %v51 = vunpack.c.h.b16 %v26
    %v52 = vunpack.c.l.b16 %v27
    %v53 = vunpack.c.h.b16 %v27
    %v54 = vunpack.c.l.b16 %v28
    %v55 = vunpack.c.h.b16 %v28
    %v56 = vunpack.c.l.b16 %v29
    %v57 = vunpack.c.h.b16 %v29
    %v58 = vpack.c.b16 %v50, %v46
    %v59 = vpack.c.b16 %v51, %v47
    %v60 = vpack.c.b16 %v52, %v48
    %v61 = vpack.c.b16 %v53, %v49
    %v62 = vpack.c.b16 %v54, %v54
    %v63 = vpack.c.b16 %v55, %v55
    %v64 = vpack.c.b16 %v56, %v56
    %v65 = vpack.c.b16 %v57, %v57
    %vm70 = vcmask 162816
    %v72 = vsel %vm70, %v23, 0
    %vm74 = vcmask 1041408
    %v76 = vsel %vm74, %v62, 0
    %v79 = vsel %vm74, %v63, 0
    %v82 = vsel %vm74, %v64, 0
    %v85 = vsel %vm74, %v65, 0
    %87 = vmatpush.bf16.msra.mxu0 0
    %88 = vmatpush.bf16.msra.mxu0 0
    %89 = vmatpush.bf16.msra.mxu0 0
    %90 = vmatpush.bf16.msra.mxu0 0
    %91 = vmatpush.bf16.msra.mxu0 0
    %92 = vmatpush.bf16.msra.mxu0 0
    %93 = vmatpush.bf16.msra.mxu0 %v76
    %94 = vmatpush.bf16.msra.mxu0 %v58
    %95 = vmatmul.bf16.gmra.mxu0 %v72
    %v96 = vpop.f32.mrf.mxu0
    %v97 = vadd.f32 %v32, %v96
    %v98 = vpop.f32.mrf.mxu0
    %99 = vdwg.mxu0
    %100 = vmatpush.bf16.msra.mxu0 0
    %101 = vmatpush.bf16.msra.mxu0 0
    %102 = vmatpush.bf16.msra.mxu0 0
    %103 = vmatpush.bf16.msra.mxu0 0
    %104 = vmatpush.bf16.msra.mxu0 0
    %105 = vmatpush.bf16.msra.mxu0 0
    %106 = vmatpush.bf16.msra.mxu0 %v79
    %107 = vmatpush.bf16.msra.mxu0 %v59
    %108 = vmatmul.bf16.gmra.mxu0 %v72
    %v109 = vpop.f32.mrf.mxu0
    %v110 = vadd.f32 %v33, %v109
    %v111 = vpop.f32.mrf.mxu0
    %112 = vdwg.mxu0
    %113 = vmatpush.bf16.msra.mxu0 0
    %114 = vmatpush.bf16.msra.mxu0 0
    %115 = vmatpush.bf16.msra.mxu0 0
    %116 = vmatpush.bf16.msra.mxu0 0
    %117 = vmatpush.bf16.msra.mxu0 0
    %118 = vmatpush.bf16.msra.mxu0 0
    %119 = vmatpush.bf16.msra.mxu0 %v82
    %120 = vmatpush.bf16.msra.mxu0 %v60
    %121 = vmatmul.bf16.gmra.mxu0 %v72
    %v122 = vpop.f32.mrf.mxu0
    %v123 = vadd.f32 %v34, %v122
    %v124 = vpop.f32.mrf.mxu0
    %125 = vdwg.mxu0
    %126 = vmatpush.bf16.msra.mxu0 0
    %127 = vmatpush.bf16.msra.mxu0 0
    %128 = vmatpush.bf16.msra.mxu0 0
    %129 = vmatpush.bf16.msra.mxu0 0
    %130 = vmatpush.bf16.msra.mxu0 0
    %131 = vmatpush.bf16.msra.mxu0 0
    %132 = vmatpush.bf16.msra.mxu0 %v85
    %133 = vmatpush.bf16.msra.mxu0 %v61
    %134 = vmatmul.bf16.gmra.mxu0 %v72
    %v135 = vpop.f32.mrf.mxu0
    %v136 = vadd.f32 %v35, %v135
    %v137 = vpop.f32.mrf.mxu0
    %138 = vdwg.mxu0
    %v139 = vmax.f32 %v97, 0.0
    %v140 = vmax.f32 %v110, 0.0
    %v141 = vmax.f32 %v123, 0.0
    %v142 = vmax.f32 %v136, 0.0
    %v143 = vpack.c.bf16 %v139, %v139
    %v144 = vpack.c.bf16 %v140, %v140
    %v145 = vpack.c.bf16 %v141, %v141
    %v146 = vpack.c.bf16 %v142, %v142
    %v147 = vld [vmem:[%s3] sm:$0xff]
    %v148 = vld [vmem:[%s3 + $0x8] sm:$0xff]
    %v149 = vld [vmem:[%s3 + $0x10] sm:$0xff]
    %v150 = vld [vmem:[%s3 + $0x18] sm:$0xf]
    %v151 = vld [vmem:[%s3 + $0x1c] sm:$0xff]
    %v152 = vld [vmem:[%s3 + $0x24] sm:$0xff]
    %v153 = vld [vmem:[%s3 + $0x2c] sm:$0xff]
    %v154 = vld [vmem:[%s3 + $0x34] sm:$0xf]
    %v155 = vld [vmem:[%s3 + $0x38] sm:$0xff]
    %v156 = vld [vmem:[%s3 + $0x40] sm:$0xff]
    %v157 = vld [vmem:[%s3 + $0x48] sm:$0xff]
    %v158 = vld [vmem:[%s3 + $0x50] sm:$0xf]
    %v159 = vld [vmem:[%s3 + $0x54] sm:$0xff]
    %v160 = vld [vmem:[%s3 + $0x5c] sm:$0xff]
    %v161 = vld [vmem:[%s3 + $0x64] sm:$0xff]
    %v162 = vld [vmem:[%s3 + $0x6c] sm:$0xf]
    %v163 = vld [vmem:[%s3 + $0x70] sm:$0xff]
    %v164 = vld [vmem:[%s3 + $0x78] sm:$0xff]
    %v165 = vld [vmem:[%s3 + $0x80] sm:$0xff]
    %v166 = vld [vmem:[%s3 + $0x88] sm:$0xf]
    %v167 = vld [vmem:[%s3 + $0x8c] sm:$0xff]
    %v168 = vld [vmem:[%s3 + $0x94] sm:$0xff]
    %v169 = vld [vmem:[%s3 + $0x9c] sm:$0xff]
    %v170 = vld [vmem:[%s3 + $0xa4] sm:$0xf]
    %v171 = vld [vmem:[%s3 + $0xa8] sm:$0xff]
    %v172 = vld [vmem:[%s3 + $0xb0] sm:$0xff]
    %v173 = vld [vmem:[%s3 + $0xb8] sm:$0xff]
    %v174 = vld [vmem:[%s3 + $0xc0] sm:$0xf]
    %v175 = vld [vmem:[%s3 + $0xc4] sm:$0xff]
    %v176 = vld [vmem:[%s3 + $0xcc] sm:$0xff]
    %v177 = vld [vmem:[%s3 + $0xd4] sm:$0xff]
    %v178 = vld [vmem:[%s3 + $0xdc] sm:$0xf]
    %v179 = vld [vmem:[%s3 + $0xe0] sm:$0xff]
    %v180 = vld [vmem:[%s3 + $0xe8] sm:$0xff]
    %v181 = vld [vmem:[%s3 + $0xf0] sm:$0xff]
    %v182 = vld [vmem:[%s3 + $0xf8] sm:$0xf]
    %v183 = vld [vmem:[%s3 + $0xfc] sm:$0xff]
    %v184 = vld [vmem:[%s3 + $0x104] sm:$0xff]
    %v185 = vld [vmem:[%s3 + $0x10c] sm:$0xff]
    %v186 = vld [vmem:[%s3 + $0x114] sm:$0xf]
    %v187 = vld [vmem:[%s3 + $0x118] sm:$0xff]
    %v188 = vld [vmem:[%s3 + $0x120] sm:$0xff]
    %v189 = vld [vmem:[%s3 + $0x128] sm:$0xff]
    %v190 = vld [vmem:[%s3 + $0x130] sm:$0xf]
    %v191 = vld [vmem:[%s3 + $0x134] sm:$0xff]
    %v192 = vld [vmem:[%s3 + $0x13c] sm:$0xff]
    %v193 = vld [vmem:[%s3 + $0x144] sm:$0xff]
    %v194 = vld [vmem:[%s3 + $0x14c] sm:$0xf]
    %v195 = vld [vmem:[%s3 + $0x150] sm:$0xff]
    %v196 = vld [vmem:[%s3 + $0x158] sm:$0xff]
    %v197 = vld [vmem:[%s3 + $0x160] sm:$0xff]
    %v198 = vld [vmem:[%s3 + $0x168] sm:$0xf]
    %v199 = vld [vmem:[%s3 + $0x16c] sm:$0xff]
    %v200 = vld [vmem:[%s3 + $0x174] sm:$0xff]
    %v201 = vld [vmem:[%s3 + $0x17c] sm:$0xff]
    %v202 = vld [vmem:[%s3 + $0x184] sm:$0xf]
    %v203 = vld [vmem:[%s3 + $0x188] sm:$0xff]
    %v204 = vld [vmem:[%s3 + $0x190] sm:$0xff]
    %v205 = vld [vmem:[%s3 + $0x198] sm:$0xff]
    %v206 = vld [vmem:[%s3 + $0x1a0] sm:$0xf]
    %v207 = vld [vmem:[%s3 + $0x1a4] sm:$0xff]
    %v208 = vld [vmem:[%s3 + $0x1ac] sm:$0xff]
    %v209 = vld [vmem:[%s3 + $0x1b4] sm:$0xff]
    %v210 = vld [vmem:[%s3 + $0x1bc] sm:$0xf]
    %v211 = vld [vmem:[%s3 + $0x1c0] sm:$0xff]
    %v212 = vld [vmem:[%s3 + $0x1c8] sm:$0xff]
    %v213 = vld [vmem:[%s3 + $0x1d0] sm:$0xff]
    %v214 = vld [vmem:[%s3 + $0x1d8] sm:$0xf]
    %v215 = vld [vmem:[%s3 + $0x1dc] sm:$0xff]
    %v216 = vld [vmem:[%s3 + $0x1e4] sm:$0xff]
    %v217 = vld [vmem:[%s3 + $0x1ec] sm:$0xff]
    %v218 = vld [vmem:[%s3 + $0x1f4] sm:$0xf]
    %v219 = vld [vmem:[%s3 + $0x1f8] sm:$0xff]
    %v220 = vld [vmem:[%s3 + $0x200] sm:$0xff]
    %v221 = vld [vmem:[%s3 + $0x208] sm:$0xff]
    %v222 = vld [vmem:[%s3 + $0x210] sm:$0xf]
    %v223 = vld [vmem:[%s3 + $0x214] sm:$0xff]
    %v224 = vld [vmem:[%s3 + $0x21c] sm:$0xff]
    %v225 = vld [vmem:[%s3 + $0x224] sm:$0xff]
    %v226 = vld [vmem:[%s3 + $0x22c] sm:$0xf]
    %v227 = vld [vmem:[%s3 + $0x230] sm:$0xff]
    %v228 = vld [vmem:[%s3 + $0x238] sm:$0xff]
    %v229 = vld [vmem:[%s3 + $0x240] sm:$0xff]
    %v230 = vld [vmem:[%s3 + $0x248] sm:$0xf]
    %v231 = vld [vmem:[%s3 + $0x24c] sm:$0xff]
    %v232 = vld [vmem:[%s3 + $0x254] sm:$0xff]
    %v233 = vld [vmem:[%s3 + $0x25c] sm:$0xff]
    %v234 = vld [vmem:[%s3 + $0x264] sm:$0xf]
    %v235 = vld [vmem:[%s3 + $0x268] sm:$0xff]
    %v236 = vld [vmem:[%s3 + $0x270] sm:$0xff]
    %v237 = vld [vmem:[%s3 + $0x278] sm:$0xff]
    %v238 = vld [vmem:[%s3 + $0x280] sm:$0xf]
    %v239 = vld [vmem:[%s3 + $0x284] sm:$0xff]
    %v240 = vld [vmem:[%s3 + $0x28c] sm:$0xff]
    %v241 = vld [vmem:[%s3 + $0x294] sm:$0xff]
    %v242 = vld [vmem:[%s3 + $0x29c] sm:$0xf]
    %v243 = vld [vmem:[%s3 + $0x2a0] sm:$0xff]
    %v244 = vld [vmem:[%s3 + $0x2a8] sm:$0xff]
    %v245 = vld [vmem:[%s3 + $0x2b0] sm:$0xff]
    %v246 = vld [vmem:[%s3 + $0x2b8] sm:$0xf]
    %v247 = vld [vmem:[%s3 + $0x2bc] sm:$0xff]
    %v248 = vld [vmem:[%s3 + $0x2c4] sm:$0xff]
    %v249 = vld [vmem:[%s3 + $0x2cc] sm:$0xff]
    %v250 = vld [vmem:[%s3 + $0x2d4] sm:$0xf]
    %v251 = vld [vmem:[%s3 + $0x2d8] sm:$0xff]
    %v252 = vld [vmem:[%s3 + $0x2e0] sm:$0xff]
    %v253 = vld [vmem:[%s3 + $0x2e8] sm:$0xff]
    %v254 = vld [vmem:[%s3 + $0x2f0] sm:$0xf]
    %v255 = vld [vmem:[%s3 + $0x2f4] sm:$0xff]
    %v256 = vld [vmem:[%s3 + $0x2fc] sm:$0xff]
    %v257 = vld [vmem:[%s3 + $0x304] sm:$0xff]
    %v258 = vld [vmem:[%s3 + $0x30c] sm:$0xf]
    %v259 = vld [vmem:[%s3 + $0x310] sm:$0xff]
    %v260 = vld [vmem:[%s3 + $0x318] sm:$0xff]
    %v261 = vld [vmem:[%s3 + $0x320] sm:$0xff]
    %v262 = vld [vmem:[%s3 + $0x328] sm:$0xf]
    %v263 = vld [vmem:[%s3 + $0x32c] sm:$0xff]
    %v264 = vld [vmem:[%s3 + $0x334] sm:$0xff]
    %v265 = vld [vmem:[%s3 + $0x33c] sm:$0xff]
    %v266 = vld [vmem:[%s3 + $0x344] sm:$0xf]
    %v267 = vld [vmem:[%s3 + $0x348] sm:$0xff]
    %v268 = vld [vmem:[%s3 + $0x350] sm:$0xff]
    %v269 = vld [vmem:[%s3 + $0x358] sm:$0xff]
    %v270 = vld [vmem:[%s3 + $0x360] sm:$0xf]
    %v271 = vld [vmem:[%s3 + $0x364] sm:$0xff]
    %v272 = vld [vmem:[%s3 + $0x36c] sm:$0xff]
    %v273 = vld [vmem:[%s3 + $0x374] sm:$0xff]
    %v274 = vld [vmem:[%s3 + $0x37c] sm:$0xf]
    %v275 = vld [vmem:[%s3 + $0x380] sm:$0xff]
    %v276 = vld [vmem:[%s3 + $0x388] sm:$0xff]
    %v277 = vld [vmem:[%s3 + $0x390] sm:$0xff]
    %v278 = vld [vmem:[%s3 + $0x398] sm:$0xf]
    %v279 = vld [vmem:[%s3 + $0x39c] sm:$0xff]
    %v280 = vld [vmem:[%s3 + $0x3a4] sm:$0xff]
    %v281 = vld [vmem:[%s3 + $0x3ac] sm:$0xff]
    %v282 = vld [vmem:[%s3 + $0x3b4] sm:$0xf]
    %v283 = vld [vmem:[%s3 + $0x3b8] sm:$0xff]
    %v284 = vld [vmem:[%s3 + $0x3c0] sm:$0xff]
    %v285 = vld [vmem:[%s3 + $0x3c8] sm:$0xff]
    %v286 = vld [vmem:[%s3 + $0x3d0] sm:$0xf]
    %v287 = vld [vmem:[%s3 + $0x3d4] sm:$0xff]
    %v288 = vld [vmem:[%s3 + $0x3dc] sm:$0xff]
    %v289 = vld [vmem:[%s3 + $0x3e4] sm:$0xff]
    %v290 = vld [vmem:[%s3 + $0x3ec] sm:$0xf]
    %v291 = vld [vmem:[%s3 + $0x3f0] sm:$0xff]
    %v292 = vld [vmem:[%s3 + $0x3f8] sm:$0xff]
    %v293 = vld [vmem:[%s3 + $0x400] sm:$0xff]
    %v294 = vld [vmem:[%s3 + $0x408] sm:$0xf]
    %v295 = vld [vmem:[%s3 + $0x40c] sm:$0xff]
    %v296 = vld [vmem:[%s3 + $0x414] sm:$0xff]
    %v297 = vld [vmem:[%s3 + $0x41c] sm:$0xff]
    %v298 = vld [vmem:[%s3 + $0x424] sm:$0xf]
    %v299 = vld [vmem:[%s3 + $0x428] sm:$0xff]
    %v300 = vld [vmem:[%s3 + $0x430] sm:$0xff]
    %v301 = vld [vmem:[%s3 + $0x438] sm:$0xff]
    %v302 = vld [vmem:[%s3 + $0x440] sm:$0xf]
    %v303 = vld [vmem:[%s3 + $0x444] sm:$0xff]
    %v304 = vld [vmem:[%s3 + $0x44c] sm:$0xff]
    %v305 = vld [vmem:[%s3 + $0x454] sm:$0xff]
    %v306 = vld [vmem:[%s3 + $0x45c] sm:$0xf]
    %v307 = vld [vmem:[%s3 + $0x460] sm:$0xff]
    %v308 = vld [vmem:[%s3 + $0x468] sm:$0xff]
    %v309 = vld [vmem:[%s3 + $0x470] sm:$0xff]
    %v310 = vld [vmem:[%s3 + $0x478] sm:$0xf]
    %v311 = vld [vmem:[%s3 + $0x47c] sm:$0xff]
    %v312 = vld [vmem:[%s3 + $0x484] sm:$0xff]
    %v313 = vld [vmem:[%s3 + $0x48c] sm:$0xff]
    %v314 = vld [vmem:[%s3 + $0x494] sm:$0xf]
    %v315 = vld [vmem:[%s3 + $0x498] sm:$0xff]
    %v316 = vld [vmem:[%s3 + $0x4a0] sm:$0xff]
    %v317 = vld [vmem:[%s3 + $0x4a8] sm:$0xff]
    %v318 = vld [vmem:[%s3 + $0x4b0] sm:$0xf]
    %v319 = vld [vmem:[%s3 + $0x4b4] sm:$0xff]
    %v320 = vld [vmem:[%s3 + $0x4bc] sm:$0xff]
    %v321 = vld [vmem:[%s3 + $0x4c4] sm:$0xff]
    %v322 = vld [vmem:[%s3 + $0x4cc] sm:$0xf]
    %v323 = vld [vmem:[%s3 + $0x4d0] sm:$0xff]
    %v324 = vld [vmem:[%s3 + $0x4d8] sm:$0xff]
    %v325 = vld [vmem:[%s3 + $0x4e0] sm:$0xff]
    %v326 = vld [vmem:[%s3 + $0x4e8] sm:$0xf]
    %v327 = vld [vmem:[%s3 + $0x4ec] sm:$0xff]
    %v328 = vld [vmem:[%s3 + $0x4f4] sm:$0xff]
    %v329 = vld [vmem:[%s3 + $0x4fc] sm:$0xff]
    %v330 = vld [vmem:[%s3 + $0x504] sm:$0xf]
    %v331 = vld [vmem:[%s3 + $0x508] sm:$0xff]
    %v332 = vld [vmem:[%s3 + $0x510] sm:$0xff]
    %v333 = vld [vmem:[%s3 + $0x518] sm:$0xff]
    %v334 = vld [vmem:[%s3 + $0x520] sm:$0xf]
    %v335 = vld [vmem:[%s3 + $0x524] sm:$0xff]
    %v336 = vld [vmem:[%s3 + $0x52c] sm:$0xff]
    %v337 = vld [vmem:[%s3 + $0x534] sm:$0xff]
    %v338 = vld [vmem:[%s3 + $0x53c] sm:$0xf]
    %v339 = vld [vmem:[%s3 + $0x540] sm:$0xff]
    %v340 = vld [vmem:[%s3 + $0x548] sm:$0xff]
    %v341 = vld [vmem:[%s3 + $0x550] sm:$0xff]
    %v342 = vld [vmem:[%s3 + $0x558] sm:$0xf]
    %v343 = vld [vmem:[%s3 + $0x55c] sm:$0xff]
    %v344 = vld [vmem:[%s3 + $0x564] sm:$0xff]
    %v345 = vld [vmem:[%s3 + $0x56c] sm:$0xff]
    %v346 = vld [vmem:[%s3 + $0x574] sm:$0xf]
    %v347 = vld [vmem:[%s3 + $0x578] sm:$0xff]
    %v348 = vld [vmem:[%s3 + $0x580] sm:$0xff]
    %v349 = vld [vmem:[%s3 + $0x588] sm:$0xff]
    %v350 = vld [vmem:[%s3 + $0x590] sm:$0xf]
    %v351 = vld [vmem:[%s3 + $0x594] sm:$0xff]
    %v352 = vld [vmem:[%s3 + $0x59c] sm:$0xff]
    %v353 = vld [vmem:[%s3 + $0x5a4] sm:$0xff]
    %v354 = vld [vmem:[%s3 + $0x5ac] sm:$0xf]
    %v355 = vld [vmem:[%s3 + $0x5b0] sm:$0xff]
    %v356 = vld [vmem:[%s3 + $0x5b8] sm:$0xff]
    %v357 = vld [vmem:[%s3 + $0x5c0] sm:$0xff]
    %v358 = vld [vmem:[%s3 + $0x5c8] sm:$0xf]
    %v359 = vld [vmem:[%s3 + $0x5cc] sm:$0xff]
    %v360 = vld [vmem:[%s3 + $0x5d4] sm:$0xff]
    %v361 = vld [vmem:[%s3 + $0x5dc] sm:$0xff]
    %v362 = vld [vmem:[%s3 + $0x5e4] sm:$0xf]
    %v363 = vld [vmem:[%s3 + $0x5e8] sm:$0xff]
    %v364 = vld [vmem:[%s3 + $0x5f0] sm:$0xff]
    %v365 = vld [vmem:[%s3 + $0x5f8] sm:$0xff]
    %v366 = vld [vmem:[%s3 + $0x600] sm:$0xf]
    %v367 = vld [vmem:[%s3 + $0x604] sm:$0xff]
    %v368 = vld [vmem:[%s3 + $0x60c] sm:$0xff]
    %v369 = vld [vmem:[%s3 + $0x614] sm:$0xff]
    %v370 = vld [vmem:[%s3 + $0x61c] sm:$0xf]
    %v371 = vld [vmem:[%s3 + $0x620] sm:$0xff]
    %v372 = vld [vmem:[%s3 + $0x628] sm:$0xff]
    %v373 = vld [vmem:[%s3 + $0x630] sm:$0xff]
    %v374 = vld [vmem:[%s3 + $0x638] sm:$0xf]
    %v375 = vld [vmem:[%s3 + $0x63c] sm:$0xff]
    %v376 = vld [vmem:[%s3 + $0x644] sm:$0xff]
    %v377 = vld [vmem:[%s3 + $0x64c] sm:$0xff]
    %v378 = vld [vmem:[%s3 + $0x654] sm:$0xf]
    %v379 = vld [vmem:[%s3 + $0x658] sm:$0xff]
    %v380 = vld [vmem:[%s3 + $0x660] sm:$0xff]
    %v381 = vld [vmem:[%s3 + $0x668] sm:$0xff]
    %v382 = vld [vmem:[%s3 + $0x670] sm:$0xf]
    %v383 = vld [vmem:[%s3 + $0x674] sm:$0xff]
    %v384 = vld [vmem:[%s3 + $0x67c] sm:$0xff]
    %v385 = vld [vmem:[%s3 + $0x684] sm:$0xff]
    %v386 = vld [vmem:[%s3 + $0x68c] sm:$0xf]
    %v387 = vld [vmem:[%s3 + $0x690] sm:$0xff]
    %v388 = vld [vmem:[%s3 + $0x698] sm:$0xff]
    %v389 = vld [vmem:[%s3 + $0x6a0] sm:$0xff]
    %v390 = vld [vmem:[%s3 + $0x6a8] sm:$0xf]
    %v391 = vld [vmem:[%s3 + $0x6ac] sm:$0xff]
    %v392 = vld [vmem:[%s3 + $0x6b4] sm:$0xff]
    %v393 = vld [vmem:[%s3 + $0x6bc] sm:$0xff]
    %v394 = vld [vmem:[%s3 + $0x6c4] sm:$0xf]
    %v395 = vld [vmem:[%s3 + $0x6c8] sm:$0xff]
    %v396 = vld [vmem:[%s3 + $0x6d0] sm:$0xff]
    %v397 = vld [vmem:[%s3 + $0x6d8] sm:$0xff]
    %v398 = vld [vmem:[%s3 + $0x6e0] sm:$0xf]
    %v399 = vld [vmem:[%s3 + $0x6e4] sm:$0xff]
    %v400 = vld [vmem:[%s3 + $0x6ec] sm:$0xff]
    %v401 = vld [vmem:[%s3 + $0x6f4] sm:$0xff]
    %v402 = vld [vmem:[%s3 + $0x6fc] sm:$0xf]
    %v403 = vld [vmem:[%s4] sm:$0xff]
    %v405 = vperm.slane %v403, 0
    %v406 = vperm.slane %v403, 1
    %v407 = vperm.slane %v403, 2
    %v408 = vperm.slane %v403, 3
    %v409 = vperm.slane %v403, 4
    %v410 = vperm.slane %v403, 5
    %v411 = vperm.slane %v403, 6
    %v675 = vunpack.c.l.b16 %v147
    %v676 = vunpack.c.h.b16 %v147
    %v677 = vunpack.c.l.b16 %v148
    %v678 = vunpack.c.h.b16 %v148
    %v679 = vunpack.c.l.b16 %v149
    %v680 = vunpack.c.h.b16 %v149
    %v681 = vunpack.c.l.b16 %v150
    %v682 = vunpack.c.l.b16 %v151
    %v683 = vunpack.c.h.b16 %v151
    %v684 = vunpack.c.l.b16 %v152
    %v685 = vunpack.c.h.b16 %v152
    %v686 = vunpack.c.l.b16 %v153
    %v687 = vunpack.c.h.b16 %v153
    %v688 = vunpack.c.l.b16 %v154
    %v689 = vunpack.c.l.b16 %v155
    %v690 = vunpack.c.h.b16 %v155
    %v691 = vunpack.c.l.b16 %v156
    %v692 = vunpack.c.h.b16 %v156
    %v693 = vunpack.c.l.b16 %v157
    %v694 = vunpack.c.h.b16 %v157
    %v695 = vunpack.c.l.b16 %v158
    %v696 = vunpack.c.l.b16 %v159
    %v697 = vunpack.c.h.b16 %v159
    %v698 = vunpack.c.l.b16 %v160
    %v699 = vunpack.c.h.b16 %v160
    %v700 = vunpack.c.l.b16 %v161
    %v701 = vunpack.c.h.b16 %v161
    %v702 = vunpack.c.l.b16 %v162
    %v703 = vunpack.c.l.b16 %v163
    %v704 = vunpack.c.h.b16 %v163
    %v705 = vunpack.c.l.b16 %v164
    %v706 = vunpack.c.h.b16 %v164
    %v707 = vunpack.c.l.b16 %v165
    %v708 = vunpack.c.h.b16 %v165
    %v709 = vunpack.c.l.b16 %v166
    %v710 = vunpack.c.l.b16 %v167
    %v711 = vunpack.c.h.b16 %v167
    %v712 = vunpack.c.l.b16 %v168
    %v713 = vunpack.c.h.b16 %v168
    %v714 = vunpack.c.l.b16 %v169
    %v715 = vunpack.c.h.b16 %v169
    %v716 = vunpack.c.l.b16 %v170
    %v717 = vunpack.c.l.b16 %v171
    %v718 = vunpack.c.h.b16 %v171
    %v719 = vunpack.c.l.b16 %v172
    %v720 = vunpack.c.h.b16 %v172
    %v721 = vunpack.c.l.b16 %v173
    %v722 = vunpack.c.h.b16 %v173
    %v723 = vunpack.c.l.b16 %v174
    %v724 = vunpack.c.l.b16 %v175
    %v725 = vunpack.c.h.b16 %v175
    %v726 = vunpack.c.l.b16 %v176
    %v727 = vunpack.c.h.b16 %v176
    %v728 = vunpack.c.l.b16 %v177
    %v729 = vunpack.c.h.b16 %v177
    %v730 = vunpack.c.l.b16 %v178
    %v731 = vunpack.c.l.b16 %v179
    %v732 = vunpack.c.h.b16 %v179
    %v733 = vunpack.c.l.b16 %v180
    %v734 = vunpack.c.h.b16 %v180
    %v735 = vunpack.c.l.b16 %v181
    %v736 = vunpack.c.h.b16 %v181
    %v737 = vunpack.c.l.b16 %v182
    %v738 = vunpack.c.l.b16 %v183
    %v739 = vunpack.c.h.b16 %v183
    %v740 = vunpack.c.l.b16 %v184
    %v741 = vunpack.c.h.b16 %v184
    %v742 = vunpack.c.l.b16 %v185
    %v743 = vunpack.c.h.b16 %v185
    %v744 = vunpack.c.l.b16 %v186
    %v745 = vunpack.c.l.b16 %v187
    %v746 = vunpack.c.h.b16 %v187
    %v747 = vunpack.c.l.b16 %v188
    %v748 = vunpack.c.h.b16 %v188
    %v749 = vunpack.c.l.b16 %v189
    %v750 = vunpack.c.h.b16 %v189
    %v751 = vunpack.c.l.b16 %v190
    %v752 = vunpack.c.l.b16 %v191
    %v753 = vunpack.c.h.b16 %v191
    %v754 = vunpack.c.l.b16 %v192
    %v755 = vunpack.c.h.b16 %v192
    %v756 = vunpack.c.l.b16 %v193
    %v757 = vunpack.c.h.b16 %v193
    %v758 = vunpack.c.l.b16 %v194
    %v759 = vunpack.c.l.b16 %v195
    %v760 = vunpack.c.h.b16 %v195
    %v761 = vunpack.c.l.b16 %v196
    %v762 = vunpack.c.h.b16 %v196
    %v763 = vunpack.c.l.b16 %v197
    %v764 = vunpack.c.h.b16 %v197
    %v765 = vunpack.c.l.b16 %v198
    %v766 = vunpack.c.l.b16 %v199
    %v767 = vunpack.c.h.b16 %v199
    %v768 = vunpack.c.l.b16 %v200
    %v769 = vunpack.c.h.b16 %v200
    %v770 = vunpack.c.l.b16 %v201
    %v771 = vunpack.c.h.b16 %v201
    %v772 = vunpack.c.l.b16 %v202
    %v773 = vunpack.c.l.b16 %v203
    %v774 = vunpack.c.h.b16 %v203
    %v775 = vunpack.c.l.b16 %v204
    %v776 = vunpack.c.h.b16 %v204
    %v777 = vunpack.c.l.b16 %v205
    %v778 = vunpack.c.h.b16 %v205
    %v779 = vunpack.c.l.b16 %v206
    %v780 = vunpack.c.l.b16 %v207
    %v781 = vunpack.c.h.b16 %v207
    %v782 = vunpack.c.l.b16 %v208
    %v783 = vunpack.c.h.b16 %v208
    %v784 = vunpack.c.l.b16 %v209
    %v785 = vunpack.c.h.b16 %v209
    %v786 = vunpack.c.l.b16 %v210
    %v787 = vunpack.c.l.b16 %v211
    %v788 = vunpack.c.h.b16 %v211
    %v789 = vunpack.c.l.b16 %v212
    %v790 = vunpack.c.h.b16 %v212
    %v791 = vunpack.c.l.b16 %v213
    %v792 = vunpack.c.h.b16 %v213
    %v793 = vunpack.c.l.b16 %v214
    %v794 = vunpack.c.l.b16 %v215
    %v795 = vunpack.c.h.b16 %v215
    %v796 = vunpack.c.l.b16 %v216
    %v797 = vunpack.c.h.b16 %v216
    %v798 = vunpack.c.l.b16 %v217
    %v799 = vunpack.c.h.b16 %v217
    %v800 = vunpack.c.l.b16 %v218
    %v801 = vunpack.c.l.b16 %v219
    %v802 = vunpack.c.h.b16 %v219
    %v803 = vunpack.c.l.b16 %v220
    %v804 = vunpack.c.h.b16 %v220
    %v805 = vunpack.c.l.b16 %v221
    %v806 = vunpack.c.h.b16 %v221
    %v807 = vunpack.c.l.b16 %v222
    %v808 = vunpack.c.l.b16 %v223
    %v809 = vunpack.c.h.b16 %v223
    %v810 = vunpack.c.l.b16 %v224
    %v811 = vunpack.c.h.b16 %v224
    %v812 = vunpack.c.l.b16 %v225
    %v813 = vunpack.c.h.b16 %v225
    %v814 = vunpack.c.l.b16 %v226
    %v815 = vunpack.c.l.b16 %v227
    %v816 = vunpack.c.h.b16 %v227
    %v817 = vunpack.c.l.b16 %v228
    %v818 = vunpack.c.h.b16 %v228
    %v819 = vunpack.c.l.b16 %v229
    %v820 = vunpack.c.h.b16 %v229
    %v821 = vunpack.c.l.b16 %v230
    %v822 = vunpack.c.l.b16 %v231
    %v823 = vunpack.c.h.b16 %v231
    %v824 = vunpack.c.l.b16 %v232
    %v825 = vunpack.c.h.b16 %v232
    %v826 = vunpack.c.l.b16 %v233
    %v827 = vunpack.c.h.b16 %v233
    %v828 = vunpack.c.l.b16 %v234
    %v829 = vunpack.c.l.b16 %v235
    %v830 = vunpack.c.h.b16 %v235
    %v831 = vunpack.c.l.b16 %v236
    %v832 = vunpack.c.h.b16 %v236
    %v833 = vunpack.c.l.b16 %v237
    %v834 = vunpack.c.h.b16 %v237
    %v835 = vunpack.c.l.b16 %v238
    %v836 = vunpack.c.l.b16 %v239
    %v837 = vunpack.c.h.b16 %v239
    %v838 = vunpack.c.l.b16 %v240
    %v839 = vunpack.c.h.b16 %v240
    %v840 = vunpack.c.l.b16 %v241
    %v841 = vunpack.c.h.b16 %v241
    %v842 = vunpack.c.l.b16 %v242
    %v843 = vunpack.c.l.b16 %v243
    %v844 = vunpack.c.h.b16 %v243
    %v845 = vunpack.c.l.b16 %v244
    %v846 = vunpack.c.h.b16 %v244
    %v847 = vunpack.c.l.b16 %v245
    %v848 = vunpack.c.h.b16 %v245
    %v849 = vunpack.c.l.b16 %v246
    %v850 = vunpack.c.l.b16 %v247
    %v851 = vunpack.c.h.b16 %v247
    %v852 = vunpack.c.l.b16 %v248
    %v853 = vunpack.c.h.b16 %v248
    %v854 = vunpack.c.l.b16 %v249
    %v855 = vunpack.c.h.b16 %v249
    %v856 = vunpack.c.l.b16 %v250
    %v857 = vunpack.c.l.b16 %v251
    %v858 = vunpack.c.h.b16 %v251
    %v859 = vunpack.c.l.b16 %v252
    %v860 = vunpack.c.h.b16 %v252
    %v861 = vunpack.c.l.b16 %v253
    %v862 = vunpack.c.h.b16 %v253
    %v863 = vunpack.c.l.b16 %v254
    %v864 = vunpack.c.l.b16 %v255
    %v865 = vunpack.c.h.b16 %v255
    %v866 = vunpack.c.l.b16 %v256
    %v867 = vunpack.c.h.b16 %v256
    %v868 = vunpack.c.l.b16 %v257
    %v869 = vunpack.c.h.b16 %v257
    %v870 = vunpack.c.l.b16 %v258
    %v871 = vunpack.c.l.b16 %v259
    %v872 = vunpack.c.h.b16 %v259
    %v873 = vunpack.c.l.b16 %v260
    %v874 = vunpack.c.h.b16 %v260
    %v875 = vunpack.c.l.b16 %v261
    %v876 = vunpack.c.h.b16 %v261
    %v877 = vunpack.c.l.b16 %v262
    %v878 = vunpack.c.l.b16 %v263
    %v879 = vunpack.c.h.b16 %v263
    %v880 = vunpack.c.l.b16 %v264
    %v881 = vunpack.c.h.b16 %v264
    %v882 = vunpack.c.l.b16 %v265
    %v883 = vunpack.c.h.b16 %v265
    %v884 = vunpack.c.l.b16 %v266
    %v885 = vunpack.c.l.b16 %v267
    %v886 = vunpack.c.h.b16 %v267
    %v887 = vunpack.c.l.b16 %v268
    %v888 = vunpack.c.h.b16 %v268
    %v889 = vunpack.c.l.b16 %v269
    %v890 = vunpack.c.h.b16 %v269
    %v891 = vunpack.c.l.b16 %v270
    %v892 = vunpack.c.l.b16 %v271
    %v893 = vunpack.c.h.b16 %v271
    %v894 = vunpack.c.l.b16 %v272
    %v895 = vunpack.c.h.b16 %v272
    %v896 = vunpack.c.l.b16 %v273
    %v897 = vunpack.c.h.b16 %v273
    %v898 = vunpack.c.l.b16 %v274
    %v899 = vunpack.c.l.b16 %v275
    %v900 = vunpack.c.h.b16 %v275
    %v901 = vunpack.c.l.b16 %v276
    %v902 = vunpack.c.h.b16 %v276
    %v903 = vunpack.c.l.b16 %v277
    %v904 = vunpack.c.h.b16 %v277
    %v905 = vunpack.c.l.b16 %v278
    %v906 = vunpack.c.l.b16 %v279
    %v907 = vunpack.c.h.b16 %v279
    %v908 = vunpack.c.l.b16 %v280
    %v909 = vunpack.c.h.b16 %v280
    %v910 = vunpack.c.l.b16 %v281
    %v911 = vunpack.c.h.b16 %v281
    %v912 = vunpack.c.l.b16 %v282
    %v913 = vunpack.c.l.b16 %v283
    %v914 = vunpack.c.h.b16 %v283
    %v915 = vunpack.c.l.b16 %v284
    %v916 = vunpack.c.h.b16 %v284
    %v917 = vunpack.c.l.b16 %v285
    %v918 = vunpack.c.h.b16 %v285
    %v919 = vunpack.c.l.b16 %v286
    %v920 = vunpack.c.l.b16 %v287
    %v921 = vunpack.c.h.b16 %v287
    %v922 = vunpack.c.l.b16 %v288
    %v923 = vunpack.c.h.b16 %v288
    %v924 = vunpack.c.l.b16 %v289
    %v925 = vunpack.c.h.b16 %v289
    %v926 = vunpack.c.l.b16 %v290
    %v927 = vunpack.c.l.b16 %v291
    %v928 = vunpack.c.h.b16 %v291
    %v929 = vunpack.c.l.b16 %v292
    %v930 = vunpack.c.h.b16 %v292
    %v931 = vunpack.c.l.b16 %v293
    %v932 = vunpack.c.h.b16 %v293
    %v933 = vunpack.c.l.b16 %v294
    %v934 = vunpack.c.l.b16 %v295
    %v935 = vunpack.c.h.b16 %v295
    %v936 = vunpack.c.l.b16 %v296
    %v937 = vunpack.c.h.b16 %v296
    %v938 = vunpack.c.l.b16 %v297
    %v939 = vunpack.c.h.b16 %v297
    %v940 = vunpack.c.l.b16 %v298
    %v941 = vunpack.c.l.b16 %v299
    %v942 = vunpack.c.h.b16 %v299
    %v943 = vunpack.c.l.b16 %v300
    %v944 = vunpack.c.h.b16 %v300
    %v945 = vunpack.c.l.b16 %v301
    %v946 = vunpack.c.h.b16 %v301
    %v947 = vunpack.c.l.b16 %v302
    %v948 = vunpack.c.l.b16 %v303
    %v949 = vunpack.c.h.b16 %v303
    %v950 = vunpack.c.l.b16 %v304
    %v951 = vunpack.c.h.b16 %v304
    %v952 = vunpack.c.l.b16 %v305
    %v953 = vunpack.c.h.b16 %v305
    %v954 = vunpack.c.l.b16 %v306
    %v955 = vunpack.c.l.b16 %v307
    %v956 = vunpack.c.h.b16 %v307
    %v957 = vunpack.c.l.b16 %v308
    %v958 = vunpack.c.h.b16 %v308
    %v959 = vunpack.c.l.b16 %v309
    %v960 = vunpack.c.h.b16 %v309
    %v961 = vunpack.c.l.b16 %v310
    %v962 = vunpack.c.l.b16 %v311
    %v963 = vunpack.c.h.b16 %v311
    %v964 = vunpack.c.l.b16 %v312
    %v965 = vunpack.c.h.b16 %v312
    %v966 = vunpack.c.l.b16 %v313
    %v967 = vunpack.c.h.b16 %v313
    %v968 = vunpack.c.l.b16 %v314
    %v969 = vunpack.c.l.b16 %v315
    %v970 = vunpack.c.h.b16 %v315
    %v971 = vunpack.c.l.b16 %v316
    %v972 = vunpack.c.h.b16 %v316
    %v973 = vunpack.c.l.b16 %v317
    %v974 = vunpack.c.h.b16 %v317
    %v975 = vunpack.c.l.b16 %v318
    %v976 = vunpack.c.l.b16 %v319
    %v977 = vunpack.c.h.b16 %v319
    %v978 = vunpack.c.l.b16 %v320
    %v979 = vunpack.c.h.b16 %v320
    %v980 = vunpack.c.l.b16 %v321
    %v981 = vunpack.c.h.b16 %v321
    %v982 = vunpack.c.l.b16 %v322
    %v983 = vunpack.c.l.b16 %v323
    %v984 = vunpack.c.h.b16 %v323
    %v985 = vunpack.c.l.b16 %v324
    %v986 = vunpack.c.h.b16 %v324
    %v987 = vunpack.c.l.b16 %v325
    %v988 = vunpack.c.h.b16 %v325
    %v989 = vunpack.c.l.b16 %v326
    %v990 = vunpack.c.l.b16 %v327
    %v991 = vunpack.c.h.b16 %v327
    %v992 = vunpack.c.l.b16 %v328
    %v993 = vunpack.c.h.b16 %v328
    %v994 = vunpack.c.l.b16 %v329
    %v995 = vunpack.c.h.b16 %v329
    %v996 = vunpack.c.l.b16 %v330
    %v997 = vunpack.c.l.b16 %v331
    %v998 = vunpack.c.h.b16 %v331
    %v999 = vunpack.c.l.b16 %v332
    %v1000 = vunpack.c.h.b16 %v332
    %v1001 = vunpack.c.l.b16 %v333
    %v1002 = vunpack.c.h.b16 %v333
    %v1003 = vunpack.c.l.b16 %v334
    %v1004 = vunpack.c.l.b16 %v335
    %v1005 = vunpack.c.h.b16 %v335
    %v1006 = vunpack.c.l.b16 %v336
    %v1007 = vunpack.c.h.b16 %v336
    %v1008 = vunpack.c.l.b16 %v337
    %v1009 = vunpack.c.h.b16 %v337
    %v1010 = vunpack.c.l.b16 %v338
    %v1011 = vunpack.c.l.b16 %v339
    %v1012 = vunpack.c.h.b16 %v339
    %v1013 = vunpack.c.l.b16 %v340
    %v1014 = vunpack.c.h.b16 %v340
    %v1015 = vunpack.c.l.b16 %v341
    %v1016 = vunpack.c.h.b16 %v341
    %v1017 = vunpack.c.l.b16 %v342
    %v1018 = vunpack.c.l.b16 %v343
    %v1019 = vunpack.c.h.b16 %v343
    %v1020 = vunpack.c.l.b16 %v344
    %v1021 = vunpack.c.h.b16 %v344
    %v1022 = vunpack.c.l.b16 %v345
    %v1023 = vunpack.c.h.b16 %v345
    %v1024 = vunpack.c.l.b16 %v346
    %v1025 = vunpack.c.l.b16 %v347
    %v1026 = vunpack.c.h.b16 %v347
    %v1027 = vunpack.c.l.b16 %v348
    %v1028 = vunpack.c.h.b16 %v348
    %v1029 = vunpack.c.l.b16 %v349
    %v1030 = vunpack.c.h.b16 %v349
    %v1031 = vunpack.c.l.b16 %v350
    %v1032 = vunpack.c.l.b16 %v351
    %v1033 = vunpack.c.h.b16 %v351
    %v1034 = vunpack.c.l.b16 %v352
    %v1035 = vunpack.c.h.b16 %v352
    %v1036 = vunpack.c.l.b16 %v353
    %v1037 = vunpack.c.h.b16 %v353
    %v1038 = vunpack.c.l.b16 %v354
    %v1039 = vunpack.c.l.b16 %v355
    %v1040 = vunpack.c.h.b16 %v355
    %v1041 = vunpack.c.l.b16 %v356
    %v1042 = vunpack.c.h.b16 %v356
    %v1043 = vunpack.c.l.b16 %v357
    %v1044 = vunpack.c.h.b16 %v357
    %v1045 = vunpack.c.l.b16 %v358
    %v1046 = vunpack.c.l.b16 %v359
    %v1047 = vunpack.c.h.b16 %v359
    %v1048 = vunpack.c.l.b16 %v360
    %v1049 = vunpack.c.h.b16 %v360
    %v1050 = vunpack.c.l.b16 %v361
    %v1051 = vunpack.c.h.b16 %v361
    %v1052 = vunpack.c.l.b16 %v362
    %v1053 = vunpack.c.l.b16 %v363
    %v1054 = vunpack.c.h.b16 %v363
    %v1055 = vunpack.c.l.b16 %v364
    %v1056 = vunpack.c.h.b16 %v364
    %v1057 = vunpack.c.l.b16 %v365
    %v1058 = vunpack.c.h.b16 %v365
    %v1059 = vunpack.c.l.b16 %v366
    %v1060 = vunpack.c.l.b16 %v367
    %v1061 = vunpack.c.h.b16 %v367
    %v1062 = vunpack.c.l.b16 %v368
    %v1063 = vunpack.c.h.b16 %v368
    %v1064 = vunpack.c.l.b16 %v369
    %v1065 = vunpack.c.h.b16 %v369
    %v1066 = vunpack.c.l.b16 %v370
    %v1067 = vunpack.c.l.b16 %v371
    %v1068 = vunpack.c.h.b16 %v371
    %v1069 = vunpack.c.l.b16 %v372
    %v1070 = vunpack.c.h.b16 %v372
    %v1071 = vunpack.c.l.b16 %v373
    %v1072 = vunpack.c.h.b16 %v373
    %v1073 = vunpack.c.l.b16 %v374
    %v1074 = vunpack.c.l.b16 %v375
    %v1075 = vunpack.c.h.b16 %v375
    %v1076 = vunpack.c.l.b16 %v376
    %v1077 = vunpack.c.h.b16 %v376
    %v1078 = vunpack.c.l.b16 %v377
    %v1079 = vunpack.c.h.b16 %v377
    %v1080 = vunpack.c.l.b16 %v378
    %v1081 = vunpack.c.l.b16 %v379
    %v1082 = vunpack.c.h.b16 %v379
    %v1083 = vunpack.c.l.b16 %v380
    %v1084 = vunpack.c.h.b16 %v380
    %v1085 = vunpack.c.l.b16 %v381
    %v1086 = vunpack.c.h.b16 %v381
    %v1087 = vunpack.c.l.b16 %v382
    %v1088 = vunpack.c.l.b16 %v383
    %v1089 = vunpack.c.h.b16 %v383
    %v1090 = vunpack.c.l.b16 %v384
    %v1091 = vunpack.c.h.b16 %v384
    %v1092 = vunpack.c.l.b16 %v385
    %v1093 = vunpack.c.h.b16 %v385
    %v1094 = vunpack.c.l.b16 %v386
    %v1095 = vunpack.c.l.b16 %v387
    %v1096 = vunpack.c.h.b16 %v387
    %v1097 = vunpack.c.l.b16 %v388
    %v1098 = vunpack.c.h.b16 %v388
    %v1099 = vunpack.c.l.b16 %v389
    %v1100 = vunpack.c.h.b16 %v389
    %v1101 = vunpack.c.l.b16 %v390
    %v1102 = vunpack.c.l.b16 %v391
    %v1103 = vunpack.c.h.b16 %v391
    %v1104 = vunpack.c.l.b16 %v392
    %v1105 = vunpack.c.h.b16 %v392
    %v1106 = vunpack.c.l.b16 %v393
    %v1107 = vunpack.c.h.b16 %v393
    %v1108 = vunpack.c.l.b16 %v394
    %v1109 = vunpack.c.l.b16 %v395
    %v1110 = vunpack.c.h.b16 %v395
    %v1111 = vunpack.c.l.b16 %v396
    %v1112 = vunpack.c.h.b16 %v396
    %v1113 = vunpack.c.l.b16 %v397
    %v1114 = vunpack.c.h.b16 %v397
    %v1115 = vunpack.c.l.b16 %v398
    %v1116 = vunpack.c.l.b16 %v399
    %v1117 = vunpack.c.h.b16 %v399
    %v1118 = vunpack.c.l.b16 %v400
    %v1119 = vunpack.c.h.b16 %v400
    %v1120 = vunpack.c.l.b16 %v401
    %v1121 = vunpack.c.h.b16 %v401
    %v1122 = vunpack.c.l.b16 %v402
    %v1123 = vpack.c.b16 %v682, %v675
    %v1124 = vpack.c.b16 %v683, %v676
    %v1125 = vpack.c.b16 %v684, %v677
    %v1126 = vpack.c.b16 %v685, %v678
    %v1127 = vpack.c.b16 %v686, %v679
    %v1128 = vpack.c.b16 %v687, %v680
    %v1129 = vpack.c.b16 %v688, %v681
    %v1130 = vpack.c.b16 %v696, %v689
    %v1131 = vpack.c.b16 %v697, %v690
    %v1132 = vpack.c.b16 %v698, %v691
    %v1133 = vpack.c.b16 %v699, %v692
    %v1134 = vpack.c.b16 %v700, %v693
    %v1135 = vpack.c.b16 %v701, %v694
    %v1136 = vpack.c.b16 %v702, %v695
    %v1137 = vpack.c.b16 %v710, %v703
    %v1138 = vpack.c.b16 %v711, %v704
    %v1139 = vpack.c.b16 %v712, %v705
    %v1140 = vpack.c.b16 %v713, %v706
    %v1141 = vpack.c.b16 %v714, %v707
    %v1142 = vpack.c.b16 %v715, %v708
    %v1143 = vpack.c.b16 %v716, %v709
    %v1144 = vpack.c.b16 %v724, %v717
    %v1145 = vpack.c.b16 %v725, %v718
    %v1146 = vpack.c.b16 %v726, %v719
    %v1147 = vpack.c.b16 %v727, %v720
    %v1148 = vpack.c.b16 %v728, %v721
    %v1149 = vpack.c.b16 %v729, %v722
    %v1150 = vpack.c.b16 %v730, %v723
    %v1151 = vpack.c.b16 %v738, %v731
    %v1152 = vpack.c.b16 %v739, %v732
    %v1153 = vpack.c.b16 %v740, %v733
    %v1154 = vpack.c.b16 %v741, %v734
    %v1155 = vpack.c.b16 %v742, %v735
    %v1156 = vpack.c.b16 %v743, %v736
    %v1157 = vpack.c.b16 %v744, %v737
    %v1158 = vpack.c.b16 %v752, %v745
    %v1159 = vpack.c.b16 %v753, %v746
    %v1160 = vpack.c.b16 %v754, %v747
    %v1161 = vpack.c.b16 %v755, %v748
    %v1162 = vpack.c.b16 %v756, %v749
    %v1163 = vpack.c.b16 %v757, %v750
    %v1164 = vpack.c.b16 %v758, %v751
    %v1165 = vpack.c.b16 %v766, %v759
    %v1166 = vpack.c.b16 %v767, %v760
    %v1167 = vpack.c.b16 %v768, %v761
    %v1168 = vpack.c.b16 %v769, %v762
    %v1169 = vpack.c.b16 %v770, %v763
    %v1170 = vpack.c.b16 %v771, %v764
    %v1171 = vpack.c.b16 %v772, %v765
    %v1172 = vpack.c.b16 %v780, %v773
    %v1173 = vpack.c.b16 %v781, %v774
    %v1174 = vpack.c.b16 %v782, %v775
    %v1175 = vpack.c.b16 %v783, %v776
    %v1176 = vpack.c.b16 %v784, %v777
    %v1177 = vpack.c.b16 %v785, %v778
    %v1178 = vpack.c.b16 %v786, %v779
    %v1179 = vpack.c.b16 %v794, %v787
    %v1180 = vpack.c.b16 %v795, %v788
    %v1181 = vpack.c.b16 %v796, %v789
    %v1182 = vpack.c.b16 %v797, %v790
    %v1183 = vpack.c.b16 %v798, %v791
    %v1184 = vpack.c.b16 %v799, %v792
    %v1185 = vpack.c.b16 %v800, %v793
    %v1186 = vpack.c.b16 %v808, %v801
    %v1187 = vpack.c.b16 %v809, %v802
    %v1188 = vpack.c.b16 %v810, %v803
    %v1189 = vpack.c.b16 %v811, %v804
    %v1190 = vpack.c.b16 %v812, %v805
    %v1191 = vpack.c.b16 %v813, %v806
    %v1192 = vpack.c.b16 %v814, %v807
    %v1193 = vpack.c.b16 %v822, %v815
    %v1194 = vpack.c.b16 %v823, %v816
    %v1195 = vpack.c.b16 %v824, %v817
    %v1196 = vpack.c.b16 %v825, %v818
    %v1197 = vpack.c.b16 %v826, %v819
    %v1198 = vpack.c.b16 %v827, %v820
    %v1199 = vpack.c.b16 %v828, %v821
    %v1200 = vpack.c.b16 %v836, %v829
    %v1201 = vpack.c.b16 %v837, %v830
    %v1202 = vpack.c.b16 %v838, %v831
    %v1203 = vpack.c.b16 %v839, %v832
    %v1204 = vpack.c.b16 %v840, %v833
    %v1205 = vpack.c.b16 %v841, %v834
    %v1206 = vpack.c.b16 %v842, %v835
    %v1207 = vpack.c.b16 %v850, %v843
    %v1208 = vpack.c.b16 %v851, %v844
    %v1209 = vpack.c.b16 %v852, %v845
    %v1210 = vpack.c.b16 %v853, %v846
    %v1211 = vpack.c.b16 %v854, %v847
    %v1212 = vpack.c.b16 %v855, %v848
    %v1213 = vpack.c.b16 %v856, %v849
    %v1214 = vpack.c.b16 %v864, %v857
    %v1215 = vpack.c.b16 %v865, %v858
    %v1216 = vpack.c.b16 %v866, %v859
    %v1217 = vpack.c.b16 %v867, %v860
    %v1218 = vpack.c.b16 %v868, %v861
    %v1219 = vpack.c.b16 %v869, %v862
    %v1220 = vpack.c.b16 %v870, %v863
    %v1221 = vpack.c.b16 %v878, %v871
    %v1222 = vpack.c.b16 %v879, %v872
    %v1223 = vpack.c.b16 %v880, %v873
    %v1224 = vpack.c.b16 %v881, %v874
    %v1225 = vpack.c.b16 %v882, %v875
    %v1226 = vpack.c.b16 %v883, %v876
    %v1227 = vpack.c.b16 %v884, %v877
    %v1228 = vpack.c.b16 %v892, %v885
    %v1229 = vpack.c.b16 %v893, %v886
    %v1230 = vpack.c.b16 %v894, %v887
    %v1231 = vpack.c.b16 %v895, %v888
    %v1232 = vpack.c.b16 %v896, %v889
    %v1233 = vpack.c.b16 %v897, %v890
    %v1234 = vpack.c.b16 %v898, %v891
    %v1235 = vpack.c.b16 %v906, %v899
    %v1236 = vpack.c.b16 %v907, %v900
    %v1237 = vpack.c.b16 %v908, %v901
    %v1238 = vpack.c.b16 %v909, %v902
    %v1239 = vpack.c.b16 %v910, %v903
    %v1240 = vpack.c.b16 %v911, %v904
    %v1241 = vpack.c.b16 %v912, %v905
    %v1242 = vpack.c.b16 %v920, %v913
    %v1243 = vpack.c.b16 %v921, %v914
    %v1244 = vpack.c.b16 %v922, %v915
    %v1245 = vpack.c.b16 %v923, %v916
    %v1246 = vpack.c.b16 %v924, %v917
    %v1247 = vpack.c.b16 %v925, %v918
    %v1248 = vpack.c.b16 %v926, %v919
    %v1249 = vpack.c.b16 %v934, %v927
    %v1250 = vpack.c.b16 %v935, %v928
    %v1251 = vpack.c.b16 %v936, %v929
    %v1252 = vpack.c.b16 %v937, %v930
    %v1253 = vpack.c.b16 %v938, %v931
    %v1254 = vpack.c.b16 %v939, %v932
    %v1255 = vpack.c.b16 %v940, %v933
    %v1256 = vpack.c.b16 %v948, %v941
    %v1257 = vpack.c.b16 %v949, %v942
    %v1258 = vpack.c.b16 %v950, %v943
    %v1259 = vpack.c.b16 %v951, %v944
    %v1260 = vpack.c.b16 %v952, %v945
    %v1261 = vpack.c.b16 %v953, %v946
    %v1262 = vpack.c.b16 %v954, %v947
    %v1263 = vpack.c.b16 %v962, %v955
    %v1264 = vpack.c.b16 %v963, %v956
    %v1265 = vpack.c.b16 %v964, %v957
    %v1266 = vpack.c.b16 %v965, %v958
    %v1267 = vpack.c.b16 %v966, %v959
    %v1268 = vpack.c.b16 %v967, %v960
    %v1269 = vpack.c.b16 %v968, %v961
    %v1270 = vpack.c.b16 %v976, %v969
    %v1271 = vpack.c.b16 %v977, %v970
    %v1272 = vpack.c.b16 %v978, %v971
    %v1273 = vpack.c.b16 %v979, %v972
    %v1274 = vpack.c.b16 %v980, %v973
    %v1275 = vpack.c.b16 %v981, %v974
    %v1276 = vpack.c.b16 %v982, %v975
    %v1277 = vpack.c.b16 %v990, %v983
    %v1278 = vpack.c.b16 %v991, %v984
    %v1279 = vpack.c.b16 %v992, %v985
    %v1280 = vpack.c.b16 %v993, %v986
    %v1281 = vpack.c.b16 %v994, %v987
    %v1282 = vpack.c.b16 %v995, %v988
    %v1283 = vpack.c.b16 %v996, %v989
    %v1284 = vpack.c.b16 %v1004, %v997
    %v1285 = vpack.c.b16 %v1005, %v998
    %v1286 = vpack.c.b16 %v1006, %v999
    %v1287 = vpack.c.b16 %v1007, %v1000
    %v1288 = vpack.c.b16 %v1008, %v1001
    %v1289 = vpack.c.b16 %v1009, %v1002
    %v1290 = vpack.c.b16 %v1010, %v1003
    %v1291 = vpack.c.b16 %v1018, %v1011
    %v1292 = vpack.c.b16 %v1019, %v1012
    %v1293 = vpack.c.b16 %v1020, %v1013
    %v1294 = vpack.c.b16 %v1021, %v1014
    %v1295 = vpack.c.b16 %v1022, %v1015
    %v1296 = vpack.c.b16 %v1023, %v1016
    %v1297 = vpack.c.b16 %v1024, %v1017
    %v1298 = vpack.c.b16 %v1032, %v1025
    %v1299 = vpack.c.b16 %v1033, %v1026
    %v1300 = vpack.c.b16 %v1034, %v1027
    %v1301 = vpack.c.b16 %v1035, %v1028
    %v1302 = vpack.c.b16 %v1036, %v1029
    %v1303 = vpack.c.b16 %v1037, %v1030
    %v1304 = vpack.c.b16 %v1038, %v1031
    %v1305 = vpack.c.b16 %v1046, %v1039
    %v1306 = vpack.c.b16 %v1047, %v1040
    %v1307 = vpack.c.b16 %v1048, %v1041
    %v1308 = vpack.c.b16 %v1049, %v1042
    %v1309 = vpack.c.b16 %v1050, %v1043
    %v1310 = vpack.c.b16 %v1051, %v1044
    %v1311 = vpack.c.b16 %v1052, %v1045
    %v1312 = vpack.c.b16 %v1060, %v1053
    %v1313 = vpack.c.b16 %v1061, %v1054
    %v1314 = vpack.c.b16 %v1062, %v1055
    %v1315 = vpack.c.b16 %v1063, %v1056
    %v1316 = vpack.c.b16 %v1064, %v1057
    %v1317 = vpack.c.b16 %v1065, %v1058
    %v1318 = vpack.c.b16 %v1066, %v1059
    %v1319 = vpack.c.b16 %v1074, %v1067
    %v1320 = vpack.c.b16 %v1075, %v1068
    %v1321 = vpack.c.b16 %v1076, %v1069
    %v1322 = vpack.c.b16 %v1077, %v1070
    %v1323 = vpack.c.b16 %v1078, %v1071
    %v1324 = vpack.c.b16 %v1079, %v1072
    %v1325 = vpack.c.b16 %v1080, %v1073
    %v1326 = vpack.c.b16 %v1088, %v1081
    %v1327 = vpack.c.b16 %v1089, %v1082
    %v1328 = vpack.c.b16 %v1090, %v1083
    %v1329 = vpack.c.b16 %v1091, %v1084
    %v1330 = vpack.c.b16 %v1092, %v1085
    %v1331 = vpack.c.b16 %v1093, %v1086
    %v1332 = vpack.c.b16 %v1094, %v1087
    %v1333 = vpack.c.b16 %v1102, %v1095
    %v1334 = vpack.c.b16 %v1103, %v1096
    %v1335 = vpack.c.b16 %v1104, %v1097
    %v1336 = vpack.c.b16 %v1105, %v1098
    %v1337 = vpack.c.b16 %v1106, %v1099
    %v1338 = vpack.c.b16 %v1107, %v1100
    %v1339 = vpack.c.b16 %v1108, %v1101
    %v1340 = vpack.c.b16 %v1116, %v1109
    %v1341 = vpack.c.b16 %v1117, %v1110
    %v1342 = vpack.c.b16 %v1118, %v1111
    %v1343 = vpack.c.b16 %v1119, %v1112
    %v1344 = vpack.c.b16 %v1120, %v1113
    %v1345 = vpack.c.b16 %v1121, %v1114
    %v1346 = vpack.c.b16 %v1122, %v1115
    %1571 = vmatpush.bf16.msra.mxu0 %v1172
    %1572 = vmatpush.bf16.msra.mxu0 %v1165
    %1573 = vmatpush.bf16.msra.mxu0 %v1158
    %1574 = vmatpush.bf16.msra.mxu0 %v1151
    %1575 = vmatpush.bf16.msra.mxu0 %v1144
    %1576 = vmatpush.bf16.msra.mxu0 %v1137
    %1577 = vmatpush.bf16.msra.mxu0 %v1130
    %1578 = vmatpush.bf16.msra.mxu0 %v1123
    %1579 = vmatmul.bf16.gmra.mxu0 %v143
    %v1580 = vpop.f32.mrf.mxu0
    %v1581 = vadd.f32 %v405, %v1580
    %v1582 = vpop.f32.mrf.mxu0
    %1583 = vdwg.mxu0
    %1584 = vmatpush.bf16.msra.mxu0 %v1228
    %1585 = vmatpush.bf16.msra.mxu0 %v1221
    %1586 = vmatpush.bf16.msra.mxu0 %v1214
    %1587 = vmatpush.bf16.msra.mxu0 %v1207
    %1588 = vmatpush.bf16.msra.mxu0 %v1200
    %1589 = vmatpush.bf16.msra.mxu0 %v1193
    %1590 = vmatpush.bf16.msra.mxu0 %v1186
    %1591 = vmatpush.bf16.msra.mxu0 %v1179
    %1592 = vmatmul.bf16.gmra.mxu0 %v144
    %v1593 = vpop.f32.mrf.mxu0
    %v1594 = vadd.f32 %v1581, %v1593
    %v1595 = vpop.f32.mrf.mxu0
    %1596 = vdwg.mxu0
    %1597 = vmatpush.bf16.msra.mxu0 %v1284
    %1598 = vmatpush.bf16.msra.mxu0 %v1277
    %1599 = vmatpush.bf16.msra.mxu0 %v1270
    %1600 = vmatpush.bf16.msra.mxu0 %v1263
    %1601 = vmatpush.bf16.msra.mxu0 %v1256
    %1602 = vmatpush.bf16.msra.mxu0 %v1249
    %1603 = vmatpush.bf16.msra.mxu0 %v1242
    %1604 = vmatpush.bf16.msra.mxu0 %v1235
    %1605 = vmatmul.bf16.gmra.mxu0 %v145
    %v1606 = vpop.f32.mrf.mxu0
    %v1607 = vadd.f32 %v1594, %v1606
    %v1608 = vpop.f32.mrf.mxu0
    %1609 = vdwg.mxu0
    %1610 = vmatpush.bf16.msra.mxu0 %v1340
    %1611 = vmatpush.bf16.msra.mxu0 %v1333
    %1612 = vmatpush.bf16.msra.mxu0 %v1326
    %1613 = vmatpush.bf16.msra.mxu0 %v1319
    %1614 = vmatpush.bf16.msra.mxu0 %v1312
    %1615 = vmatpush.bf16.msra.mxu0 %v1305
    %1616 = vmatpush.bf16.msra.mxu0 %v1298
    %1617 = vmatpush.bf16.msra.mxu0 %v1291
    %1618 = vmatmul.bf16.gmra.mxu0 %v146
    %v1619 = vpop.f32.mrf.mxu0
    %v1620 = vadd.f32 %v1607, %v1619
    %v1621 = vpop.f32.mrf.mxu0
    %1622 = vdwg.mxu0
    %1623 = vmatpush.bf16.msra.mxu0 %v1173
    %1624 = vmatpush.bf16.msra.mxu0 %v1166
    %1625 = vmatpush.bf16.msra.mxu0 %v1159
    %1626 = vmatpush.bf16.msra.mxu0 %v1152
    %1627 = vmatpush.bf16.msra.mxu0 %v1145
    %1628 = vmatpush.bf16.msra.mxu0 %v1138
    %1629 = vmatpush.bf16.msra.mxu0 %v1131
    %1630 = vmatpush.bf16.msra.mxu0 %v1124
    %1631 = vmatmul.bf16.gmra.mxu0 %v143
    %v1632 = vpop.f32.mrf.mxu0
    %v1633 = vadd.f32 %v406, %v1632
    %v1634 = vpop.f32.mrf.mxu0
    %1635 = vdwg.mxu0
    %1636 = vmatpush.bf16.msra.mxu0 %v1229
    %1637 = vmatpush.bf16.msra.mxu0 %v1222
    %1638 = vmatpush.bf16.msra.mxu0 %v1215
    %1639 = vmatpush.bf16.msra.mxu0 %v1208
    %1640 = vmatpush.bf16.msra.mxu0 %v1201
    %1641 = vmatpush.bf16.msra.mxu0 %v1194
    %1642 = vmatpush.bf16.msra.mxu0 %v1187
    %1643 = vmatpush.bf16.msra.mxu0 %v1180
    %1644 = vmatmul.bf16.gmra.mxu0 %v144
    %v1645 = vpop.f32.mrf.mxu0
    %v1646 = vadd.f32 %v1633, %v1645
    %v1647 = vpop.f32.mrf.mxu0
    %1648 = vdwg.mxu0
    %1649 = vmatpush.bf16.msra.mxu0 %v1285
    %1650 = vmatpush.bf16.msra.mxu0 %v1278
    %1651 = vmatpush.bf16.msra.mxu0 %v1271
    %1652 = vmatpush.bf16.msra.mxu0 %v1264
    %1653 = vmatpush.bf16.msra.mxu0 %v1257
    %1654 = vmatpush.bf16.msra.mxu0 %v1250
    %1655 = vmatpush.bf16.msra.mxu0 %v1243
    %1656 = vmatpush.bf16.msra.mxu0 %v1236
    %1657 = vmatmul.bf16.gmra.mxu0 %v145
    %v1658 = vpop.f32.mrf.mxu0
    %v1659 = vadd.f32 %v1646, %v1658
    %v1660 = vpop.f32.mrf.mxu0
    %1661 = vdwg.mxu0
    %1662 = vmatpush.bf16.msra.mxu0 %v1341
    %1663 = vmatpush.bf16.msra.mxu0 %v1334
    %1664 = vmatpush.bf16.msra.mxu0 %v1327
    %1665 = vmatpush.bf16.msra.mxu0 %v1320
    %1666 = vmatpush.bf16.msra.mxu0 %v1313
    %1667 = vmatpush.bf16.msra.mxu0 %v1306
    %1668 = vmatpush.bf16.msra.mxu0 %v1299
    %1669 = vmatpush.bf16.msra.mxu0 %v1292
    %1670 = vmatmul.bf16.gmra.mxu0 %v146
    %v1671 = vpop.f32.mrf.mxu0
    %v1672 = vadd.f32 %v1659, %v1671
    %v1673 = vpop.f32.mrf.mxu0
    %1674 = vdwg.mxu0
    %1675 = vmatpush.bf16.msra.mxu0 %v1174
    %1676 = vmatpush.bf16.msra.mxu0 %v1167
    %1677 = vmatpush.bf16.msra.mxu0 %v1160
    %1678 = vmatpush.bf16.msra.mxu0 %v1153
    %1679 = vmatpush.bf16.msra.mxu0 %v1146
    %1680 = vmatpush.bf16.msra.mxu0 %v1139
    %1681 = vmatpush.bf16.msra.mxu0 %v1132
    %1682 = vmatpush.bf16.msra.mxu0 %v1125
    %1683 = vmatmul.bf16.gmra.mxu0 %v143
    %v1684 = vpop.f32.mrf.mxu0
    %v1685 = vadd.f32 %v407, %v1684
    %v1686 = vpop.f32.mrf.mxu0
    %1687 = vdwg.mxu0
    %1688 = vmatpush.bf16.msra.mxu0 %v1230
    %1689 = vmatpush.bf16.msra.mxu0 %v1223
    %1690 = vmatpush.bf16.msra.mxu0 %v1216
    %1691 = vmatpush.bf16.msra.mxu0 %v1209
    %1692 = vmatpush.bf16.msra.mxu0 %v1202
    %1693 = vmatpush.bf16.msra.mxu0 %v1195
    %1694 = vmatpush.bf16.msra.mxu0 %v1188
    %1695 = vmatpush.bf16.msra.mxu0 %v1181
    %1696 = vmatmul.bf16.gmra.mxu0 %v144
    %v1697 = vpop.f32.mrf.mxu0
    %v1698 = vadd.f32 %v1685, %v1697
    %v1699 = vpop.f32.mrf.mxu0
    %1700 = vdwg.mxu0
    %1701 = vmatpush.bf16.msra.mxu0 %v1286
    %1702 = vmatpush.bf16.msra.mxu0 %v1279
    %1703 = vmatpush.bf16.msra.mxu0 %v1272
    %1704 = vmatpush.bf16.msra.mxu0 %v1265
    %1705 = vmatpush.bf16.msra.mxu0 %v1258
    %1706 = vmatpush.bf16.msra.mxu0 %v1251
    %1707 = vmatpush.bf16.msra.mxu0 %v1244
    %1708 = vmatpush.bf16.msra.mxu0 %v1237
    %1709 = vmatmul.bf16.gmra.mxu0 %v145
    %v1710 = vpop.f32.mrf.mxu0
    %v1711 = vadd.f32 %v1698, %v1710
    %v1712 = vpop.f32.mrf.mxu0
    %1713 = vdwg.mxu0
    %1714 = vmatpush.bf16.msra.mxu0 %v1342
    %1715 = vmatpush.bf16.msra.mxu0 %v1335
    %1716 = vmatpush.bf16.msra.mxu0 %v1328
    %1717 = vmatpush.bf16.msra.mxu0 %v1321
    %1718 = vmatpush.bf16.msra.mxu0 %v1314
    %1719 = vmatpush.bf16.msra.mxu0 %v1307
    %1720 = vmatpush.bf16.msra.mxu0 %v1300
    %1721 = vmatpush.bf16.msra.mxu0 %v1293
    %1722 = vmatmul.bf16.gmra.mxu0 %v146
    %v1723 = vpop.f32.mrf.mxu0
    %v1724 = vadd.f32 %v1711, %v1723
    %v1725 = vpop.f32.mrf.mxu0
    %1726 = vdwg.mxu0
    %1727 = vmatpush.bf16.msra.mxu0 %v1175
    %1728 = vmatpush.bf16.msra.mxu0 %v1168
    %1729 = vmatpush.bf16.msra.mxu0 %v1161
    %1730 = vmatpush.bf16.msra.mxu0 %v1154
    %1731 = vmatpush.bf16.msra.mxu0 %v1147
    %1732 = vmatpush.bf16.msra.mxu0 %v1140
    %1733 = vmatpush.bf16.msra.mxu0 %v1133
    %1734 = vmatpush.bf16.msra.mxu0 %v1126
    %1735 = vmatmul.bf16.gmra.mxu0 %v143
    %v1736 = vpop.f32.mrf.mxu0
    %v1737 = vadd.f32 %v408, %v1736
    %v1738 = vpop.f32.mrf.mxu0
    %1739 = vdwg.mxu0
    %1740 = vmatpush.bf16.msra.mxu0 %v1231
    %1741 = vmatpush.bf16.msra.mxu0 %v1224
    %1742 = vmatpush.bf16.msra.mxu0 %v1217
    %1743 = vmatpush.bf16.msra.mxu0 %v1210
    %1744 = vmatpush.bf16.msra.mxu0 %v1203
    %1745 = vmatpush.bf16.msra.mxu0 %v1196
    %1746 = vmatpush.bf16.msra.mxu0 %v1189
    %1747 = vmatpush.bf16.msra.mxu0 %v1182
    %1748 = vmatmul.bf16.gmra.mxu0 %v144
    %v1749 = vpop.f32.mrf.mxu0
    %v1750 = vadd.f32 %v1737, %v1749
    %v1751 = vpop.f32.mrf.mxu0
    %1752 = vdwg.mxu0
    %1753 = vmatpush.bf16.msra.mxu0 %v1287
    %1754 = vmatpush.bf16.msra.mxu0 %v1280
    %1755 = vmatpush.bf16.msra.mxu0 %v1273
    %1756 = vmatpush.bf16.msra.mxu0 %v1266
    %1757 = vmatpush.bf16.msra.mxu0 %v1259
    %1758 = vmatpush.bf16.msra.mxu0 %v1252
    %1759 = vmatpush.bf16.msra.mxu0 %v1245
    %1760 = vmatpush.bf16.msra.mxu0 %v1238
    %1761 = vmatmul.bf16.gmra.mxu0 %v145
    %v1762 = vpop.f32.mrf.mxu0
    %v1763 = vadd.f32 %v1750, %v1762
    %v1764 = vpop.f32.mrf.mxu0
    %1765 = vdwg.mxu0
    %1766 = vmatpush.bf16.msra.mxu0 %v1343
    %1767 = vmatpush.bf16.msra.mxu0 %v1336
    %1768 = vmatpush.bf16.msra.mxu0 %v1329
    %1769 = vmatpush.bf16.msra.mxu0 %v1322
    %1770 = vmatpush.bf16.msra.mxu0 %v1315
    %1771 = vmatpush.bf16.msra.mxu0 %v1308
    %1772 = vmatpush.bf16.msra.mxu0 %v1301
    %1773 = vmatpush.bf16.msra.mxu0 %v1294
    %1774 = vmatmul.bf16.gmra.mxu0 %v146
    %v1775 = vpop.f32.mrf.mxu0
    %v1776 = vadd.f32 %v1763, %v1775
    %v1777 = vpop.f32.mrf.mxu0
    %1778 = vdwg.mxu0
    %1779 = vmatpush.bf16.msra.mxu0 %v1176
    %1780 = vmatpush.bf16.msra.mxu0 %v1169
    %1781 = vmatpush.bf16.msra.mxu0 %v1162
    %1782 = vmatpush.bf16.msra.mxu0 %v1155
    %1783 = vmatpush.bf16.msra.mxu0 %v1148
    %1784 = vmatpush.bf16.msra.mxu0 %v1141
    %1785 = vmatpush.bf16.msra.mxu0 %v1134
    %1786 = vmatpush.bf16.msra.mxu0 %v1127
    %1787 = vmatmul.bf16.gmra.mxu0 %v143
    %v1788 = vpop.f32.mrf.mxu0
    %v1789 = vadd.f32 %v409, %v1788
    %v1790 = vpop.f32.mrf.mxu0
    %1791 = vdwg.mxu0
    %1792 = vmatpush.bf16.msra.mxu0 %v1232
    %1793 = vmatpush.bf16.msra.mxu0 %v1225
    %1794 = vmatpush.bf16.msra.mxu0 %v1218
    %1795 = vmatpush.bf16.msra.mxu0 %v1211
    %1796 = vmatpush.bf16.msra.mxu0 %v1204
    %1797 = vmatpush.bf16.msra.mxu0 %v1197
    %1798 = vmatpush.bf16.msra.mxu0 %v1190
    %1799 = vmatpush.bf16.msra.mxu0 %v1183
    %1800 = vmatmul.bf16.gmra.mxu0 %v144
    %v1801 = vpop.f32.mrf.mxu0
    %v1802 = vadd.f32 %v1789, %v1801
    %v1803 = vpop.f32.mrf.mxu0
    %1804 = vdwg.mxu0
    %1805 = vmatpush.bf16.msra.mxu0 %v1288
    %1806 = vmatpush.bf16.msra.mxu0 %v1281
    %1807 = vmatpush.bf16.msra.mxu0 %v1274
    %1808 = vmatpush.bf16.msra.mxu0 %v1267
    %1809 = vmatpush.bf16.msra.mxu0 %v1260
    %1810 = vmatpush.bf16.msra.mxu0 %v1253
    %1811 = vmatpush.bf16.msra.mxu0 %v1246
    %1812 = vmatpush.bf16.msra.mxu0 %v1239
    %1813 = vmatmul.bf16.gmra.mxu0 %v145
    %v1814 = vpop.f32.mrf.mxu0
    %v1815 = vadd.f32 %v1802, %v1814
    %v1816 = vpop.f32.mrf.mxu0
    %1817 = vdwg.mxu0
    %1818 = vmatpush.bf16.msra.mxu0 %v1344
    %1819 = vmatpush.bf16.msra.mxu0 %v1337
    %1820 = vmatpush.bf16.msra.mxu0 %v1330
    %1821 = vmatpush.bf16.msra.mxu0 %v1323
    %1822 = vmatpush.bf16.msra.mxu0 %v1316
    %1823 = vmatpush.bf16.msra.mxu0 %v1309
    %1824 = vmatpush.bf16.msra.mxu0 %v1302
    %1825 = vmatpush.bf16.msra.mxu0 %v1295
    %1826 = vmatmul.bf16.gmra.mxu0 %v146
    %v1827 = vpop.f32.mrf.mxu0
    %v1828 = vadd.f32 %v1815, %v1827
    %v1829 = vpop.f32.mrf.mxu0
    %1830 = vdwg.mxu0
    %1831 = vmatpush.bf16.msra.mxu0 %v1177
    %1832 = vmatpush.bf16.msra.mxu0 %v1170
    %1833 = vmatpush.bf16.msra.mxu0 %v1163
    %1834 = vmatpush.bf16.msra.mxu0 %v1156
    %1835 = vmatpush.bf16.msra.mxu0 %v1149
    %1836 = vmatpush.bf16.msra.mxu0 %v1142
    %1837 = vmatpush.bf16.msra.mxu0 %v1135
    %1838 = vmatpush.bf16.msra.mxu0 %v1128
    %1839 = vmatmul.bf16.gmra.mxu0 %v143
    %v1840 = vpop.f32.mrf.mxu0
    %v1841 = vadd.f32 %v410, %v1840
    %v1842 = vpop.f32.mrf.mxu0
    %1843 = vdwg.mxu0
    %1844 = vmatpush.bf16.msra.mxu0 %v1233
    %1845 = vmatpush.bf16.msra.mxu0 %v1226
    %1846 = vmatpush.bf16.msra.mxu0 %v1219
    %1847 = vmatpush.bf16.msra.mxu0 %v1212
    %1848 = vmatpush.bf16.msra.mxu0 %v1205
    %1849 = vmatpush.bf16.msra.mxu0 %v1198
    %1850 = vmatpush.bf16.msra.mxu0 %v1191
    %1851 = vmatpush.bf16.msra.mxu0 %v1184
    %1852 = vmatmul.bf16.gmra.mxu0 %v144
    %v1853 = vpop.f32.mrf.mxu0
    %v1854 = vadd.f32 %v1841, %v1853
    %v1855 = vpop.f32.mrf.mxu0
    %1856 = vdwg.mxu0
    %1857 = vmatpush.bf16.msra.mxu0 %v1289
    %1858 = vmatpush.bf16.msra.mxu0 %v1282
    %1859 = vmatpush.bf16.msra.mxu0 %v1275
    %1860 = vmatpush.bf16.msra.mxu0 %v1268
    %1861 = vmatpush.bf16.msra.mxu0 %v1261
    %1862 = vmatpush.bf16.msra.mxu0 %v1254
    %1863 = vmatpush.bf16.msra.mxu0 %v1247
    %1864 = vmatpush.bf16.msra.mxu0 %v1240
    %1865 = vmatmul.bf16.gmra.mxu0 %v145
    %v1866 = vpop.f32.mrf.mxu0
    %v1867 = vadd.f32 %v1854, %v1866
    %v1868 = vpop.f32.mrf.mxu0
    %1869 = vdwg.mxu0
    %1870 = vmatpush.bf16.msra.mxu0 %v1345
    %1871 = vmatpush.bf16.msra.mxu0 %v1338
    %1872 = vmatpush.bf16.msra.mxu0 %v1331
    %1873 = vmatpush.bf16.msra.mxu0 %v1324
    %1874 = vmatpush.bf16.msra.mxu0 %v1317
    %1875 = vmatpush.bf16.msra.mxu0 %v1310
    %1876 = vmatpush.bf16.msra.mxu0 %v1303
    %1877 = vmatpush.bf16.msra.mxu0 %v1296
    %1878 = vmatmul.bf16.gmra.mxu0 %v146
    %v1879 = vpop.f32.mrf.mxu0
    %v1880 = vadd.f32 %v1867, %v1879
    %v1881 = vpop.f32.mrf.mxu0
    %1882 = vdwg.mxu0
    %1883 = vmatpush.bf16.msra.mxu0 %v1178
    %1884 = vmatpush.bf16.msra.mxu0 %v1171
    %1885 = vmatpush.bf16.msra.mxu0 %v1164
    %1886 = vmatpush.bf16.msra.mxu0 %v1157
    %1887 = vmatpush.bf16.msra.mxu0 %v1150
    %1888 = vmatpush.bf16.msra.mxu0 %v1143
    %1889 = vmatpush.bf16.msra.mxu0 %v1136
    %1890 = vmatpush.bf16.msra.mxu0 %v1129
    %1891 = vmatmul.bf16.gmra.mxu0 %v143
    %v1892 = vpop.f32.mrf.mxu0
    %v1893 = vadd.f32 %v411, %v1892
    %v1894 = vpop.f32.mrf.mxu0
    %1895 = vdwg.mxu0
    %1896 = vmatpush.bf16.msra.mxu0 %v1234
    %1897 = vmatpush.bf16.msra.mxu0 %v1227
    %1898 = vmatpush.bf16.msra.mxu0 %v1220
    %1899 = vmatpush.bf16.msra.mxu0 %v1213
    %1900 = vmatpush.bf16.msra.mxu0 %v1206
    %1901 = vmatpush.bf16.msra.mxu0 %v1199
    %1902 = vmatpush.bf16.msra.mxu0 %v1192
    %1903 = vmatpush.bf16.msra.mxu0 %v1185
    %1904 = vmatmul.bf16.gmra.mxu0 %v144
    %v1905 = vpop.f32.mrf.mxu0
    %v1906 = vadd.f32 %v1893, %v1905
    %v1907 = vpop.f32.mrf.mxu0
    %1908 = vdwg.mxu0
    %1909 = vmatpush.bf16.msra.mxu0 %v1290
    %1910 = vmatpush.bf16.msra.mxu0 %v1283
    %1911 = vmatpush.bf16.msra.mxu0 %v1276
    %1912 = vmatpush.bf16.msra.mxu0 %v1269
    %1913 = vmatpush.bf16.msra.mxu0 %v1262
    %1914 = vmatpush.bf16.msra.mxu0 %v1255
    %1915 = vmatpush.bf16.msra.mxu0 %v1248
    %1916 = vmatpush.bf16.msra.mxu0 %v1241
    %1917 = vmatmul.bf16.gmra.mxu0 %v145
    %v1918 = vpop.f32.mrf.mxu0
    %v1919 = vadd.f32 %v1906, %v1918
    %v1920 = vpop.f32.mrf.mxu0
    %1921 = vdwg.mxu0
    %1922 = vmatpush.bf16.msra.mxu0 %v1346
    %1923 = vmatpush.bf16.msra.mxu0 %v1339
    %1924 = vmatpush.bf16.msra.mxu0 %v1332
    %1925 = vmatpush.bf16.msra.mxu0 %v1325
    %1926 = vmatpush.bf16.msra.mxu0 %v1318
    %1927 = vmatpush.bf16.msra.mxu0 %v1311
    %1928 = vmatpush.bf16.msra.mxu0 %v1304
    %1929 = vmatpush.bf16.msra.mxu0 %v1297
    %1930 = vmatmul.bf16.gmra.mxu0 %v146
    %v1931 = vpop.f32.mrf.mxu0
    %v1932 = vadd.f32 %v1919, %v1931
    %v1933 = vpop.f32.mrf.mxu0
    %1934 = vdwg.mxu0
    %v1935 = vxor.u32 %v1620, 2147483648
    %v1936 = vxor.u32 %v1672, 2147483648
    %v1937 = vxor.u32 %v1724, 2147483648
    %v1938 = vxor.u32 %v1776, 2147483648
    %v1939 = vxor.u32 %v1828, 2147483648
    %v1940 = vxor.u32 %v1880, 2147483648
    %v1941 = vxor.u32 %v1932, 2147483648
    %v1942 = vmul.f32 %v1935, 1.442695
    %v1943 = vpow.pop %v1942
    %v1944 = vmul.f32 %v1936, 1.442695
    %v1945 = vpow.pop %v1944
    %v1946 = vmul.f32 %v1937, 1.442695
    %v1947 = vpow.pop %v1946
    %v1948 = vmul.f32 %v1938, 1.442695
    %v1949 = vpow.pop %v1948
    %v1950 = vmul.f32 %v1939, 1.442695
    %v1951 = vpow.pop %v1950
    %v1952 = vmul.f32 %v1940, 1.442695
    %v1953 = vpow.pop %v1952
    %v1954 = vmul.f32 %v1941, 1.442695
    %v1955 = vpow.pop %v1954
    %v1956 = vadd.f32 %v1943, 1.0
    %v1957 = vadd.f32 %v1945, 1.0
    %v1958 = vadd.f32 %v1947, 1.0
    %v1959 = vadd.f32 %v1949, 1.0
    %v1960 = vadd.f32 %v1951, 1.0
    %v1961 = vadd.f32 %v1953, 1.0
    %v1962 = vadd.f32 %v1955, 1.0
    %v1963 = vrcp.pop %v1956
    %v1964 = vmul.f32 %v1956, %v1963
    %v1965 = vsub.f32 1.0, %v1964
    %v1966 = vmul.f32 %v1963, %v1965
    %v1967 = vadd.f32 %v1963, %v1966
    %vm1968 = vweird.f32 %v1956
    %vm1969 = vweird.f32 %v1963
    %vm1970 = vmor %vm1968, %vm1969
    %v1971 = vsel %vm1970, %v1963, %v1967
    %v1972 = vand.u32 2147483647, %v1956
    %vm1973 = vcmp.eq.f32.partialorder %v1972, 8.507059e+37
    %v1974 = vand.u32 %v1956, 2147483648
    %v1975 = vor.u32 1.1754944e-38, %v1974
    %v1976 = vsel %vm1973, %v1975, %v1971
    %v1977 = vmul.f32 1.0, %v1976
    %v1978 = vrcp.pop %v1957
    %v1979 = vmul.f32 %v1957, %v1978
    %v1980 = vsub.f32 1.0, %v1979
    %v1981 = vmul.f32 %v1978, %v1980
    %v1982 = vadd.f32 %v1978, %v1981
    %vm1983 = vweird.f32 %v1957
    %vm1984 = vweird.f32 %v1978
    %vm1985 = vmor %vm1983, %vm1984
    %v1986 = vsel %vm1985, %v1978, %v1982
    %v1987 = vand.u32 2147483647, %v1957
    %vm1988 = vcmp.eq.f32.partialorder %v1987, 8.507059e+37
    %v1989 = vand.u32 %v1957, 2147483648
    %v1990 = vor.u32 1.1754944e-38, %v1989
    %v1991 = vsel %vm1988, %v1990, %v1986
    %v1992 = vmul.f32 1.0, %v1991
    %v1993 = vrcp.pop %v1958
    %v1994 = vmul.f32 %v1958, %v1993
    %v1995 = vsub.f32 1.0, %v1994
    %v1996 = vmul.f32 %v1993, %v1995
    %v1997 = vadd.f32 %v1993, %v1996
    %vm1998 = vweird.f32 %v1958
    %vm1999 = vweird.f32 %v1993
    %vm2000 = vmor %vm1998, %vm1999
    %v2001 = vsel %vm2000, %v1993, %v1997
    %v2002 = vand.u32 2147483647, %v1958
    %vm2003 = vcmp.eq.f32.partialorder %v2002, 8.507059e+37
    %v2004 = vand.u32 %v1958, 2147483648
    %v2005 = vor.u32 1.1754944e-38, %v2004
    %v2006 = vsel %vm2003, %v2005, %v2001
    %v2007 = vmul.f32 1.0, %v2006
    %v2008 = vrcp.pop %v1959
    %v2009 = vmul.f32 %v1959, %v2008
    %v2010 = vsub.f32 1.0, %v2009
    %v2011 = vmul.f32 %v2008, %v2010
    %v2012 = vadd.f32 %v2008, %v2011
    %vm2013 = vweird.f32 %v1959
    %vm2014 = vweird.f32 %v2008
    %vm2015 = vmor %vm2013, %vm2014
    %v2016 = vsel %vm2015, %v2008, %v2012
    %v2017 = vand.u32 2147483647, %v1959
    %vm2018 = vcmp.eq.f32.partialorder %v2017, 8.507059e+37
    %v2019 = vand.u32 %v1959, 2147483648
    %v2020 = vor.u32 1.1754944e-38, %v2019
    %v2021 = vsel %vm2018, %v2020, %v2016
    %v2022 = vmul.f32 1.0, %v2021
    %v2023 = vrcp.pop %v1960
    %v2024 = vmul.f32 %v1960, %v2023
    %v2025 = vsub.f32 1.0, %v2024
    %v2026 = vmul.f32 %v2023, %v2025
    %v2027 = vadd.f32 %v2023, %v2026
    %vm2028 = vweird.f32 %v1960
    %vm2029 = vweird.f32 %v2023
    %vm2030 = vmor %vm2028, %vm2029
    %v2031 = vsel %vm2030, %v2023, %v2027
    %v2032 = vand.u32 2147483647, %v1960
    %vm2033 = vcmp.eq.f32.partialorder %v2032, 8.507059e+37
    %v2034 = vand.u32 %v1960, 2147483648
    %v2035 = vor.u32 1.1754944e-38, %v2034
    %v2036 = vsel %vm2033, %v2035, %v2031
    %v2037 = vmul.f32 1.0, %v2036
    %v2038 = vrcp.pop %v1961
    %v2039 = vmul.f32 %v1961, %v2038
    %v2040 = vsub.f32 1.0, %v2039
    %v2041 = vmul.f32 %v2038, %v2040
    %v2042 = vadd.f32 %v2038, %v2041
    %vm2043 = vweird.f32 %v1961
    %vm2044 = vweird.f32 %v2038
    %vm2045 = vmor %vm2043, %vm2044
    %v2046 = vsel %vm2045, %v2038, %v2042
    %v2047 = vand.u32 2147483647, %v1961
    %vm2048 = vcmp.eq.f32.partialorder %v2047, 8.507059e+37
    %v2049 = vand.u32 %v1961, 2147483648
    %v2050 = vor.u32 1.1754944e-38, %v2049
    %v2051 = vsel %vm2048, %v2050, %v2046
    %v2052 = vmul.f32 1.0, %v2051
    %v2053 = vrcp.pop %v1962
    %v2054 = vmul.f32 %v1962, %v2053
    %v2055 = vsub.f32 1.0, %v2054
    %v2056 = vmul.f32 %v2053, %v2055
    %v2057 = vadd.f32 %v2053, %v2056
    %vm2058 = vweird.f32 %v1962
    %vm2059 = vweird.f32 %v2053
    %vm2060 = vmor %vm2058, %vm2059
    %v2061 = vsel %vm2060, %v2053, %v2057
    %v2062 = vand.u32 2147483647, %v1962
    %vm2063 = vcmp.eq.f32.partialorder %v2062, 8.507059e+37
    %v2064 = vand.u32 %v1962, 2147483648
    %v2065 = vor.u32 1.1754944e-38, %v2064
    %v2066 = vsel %vm2063, %v2065, %v2061
    %v2067 = vmul.f32 1.0, %v2066
    %2068 = vst [vmem:[#allocation2] sm:$0xff] %v1977
    %2069 = vst [vmem:[#allocation2 + $0x8] sm:$0xff] %v1992
    %2070 = vst [vmem:[#allocation2 + $0x10] sm:$0xff] %v2007
    %2071 = vst [vmem:[#allocation2 + $0x18] sm:$0xff] %v2022
    %2072 = vst [vmem:[#allocation2 + $0x20] sm:$0xff] %v2037
    %2073 = vst [vmem:[#allocation2 + $0x28] sm:$0xff] %v2052
    %2074 = vst [vmem:[#allocation2 + $0x30] sm:$0xff] %v2067
    // Predicated region
    $region22: #{decoder_forward.1} parent=1 // pred_check
      _
    $region23: #{decoder_forward.1} parent=1 // pred_check_branch
      %2076 = sbr.rel (0) target = $region25
    $region24: #{decoder_forward.1} parent=1 // pred_region
      %2078 = vsyncadd [#allocation3], 0
      %s2080 = sshll.u32 [#allocation2], 4
      %s2081 = int_to_ptr.vmem [resolvable:$true] %s2080
      %s2082 = sshll.u32 %s5, 4
      %s2083 = int_to_ptr.hbm [resolvable:$true] %s2082
      %2085 = dma.vmem_to_hbm [thread:$0]  %s2081, 896, %s2083, [#allocation3]
    $region25: #{decoder_forward.1} parent=1 // pred_fallthru
      _
    // Predicated region
    $region26: #{decoder_forward.1} parent=1 // pred_check
      _
    $region27: #{decoder_forward.1} parent=1 // pred_check_branch
      %2087 = sbr.rel (0) target = $region29
    $region28: #{decoder_forward.1} parent=1 // pred_region
      %2089 = dma.done [#allocation3], 896
    $region29: #{decoder_forward.1} parent=1 // pred_fallthru
      _
    %2090 = vsyncpa [#allocation3], 1

</llo_original>
